<compile_context>
chip_gen: v7x
topology: tpu7x:2x2x1
jax: 0.10.0
libtpu: 0.0.40
codegen_flags: <defaults>
</compile_context>

<pallas_src>
import functools

import jax
import jax.numpy as jnp
import numpy as np
from jax.experimental import pallas as pl
from jax.experimental.pallas import tpu as pltpu

block_size = 8
n_embed = 32


def _mha_kernel(x_ref, w_ref, o_ref, *, num_heads, head_size):
    # x_ref: (B, T, C)   w_ref: (C, 3*H*hs)   o_ref: (B, T, H*hs)
    x = x_ref[...].astype(jnp.float32)
    w = w_ref[...].astype(jnp.float32)
    B, T, C = x.shape
    H, hs = num_heads, head_size
    Hhs = H * hs

    # Fused Q/K/V projection for every head: one MXU matmul.
    qkv = jnp.dot(x.reshape(B * T, C), w, preferred_element_type=jnp.float32)
    qkv = qkv.reshape(B, T, 3 * Hhs)

    scale = C ** (-0.5)  # n_embed scaling, exactly as in the reference module

    # causal (tril) mask: keep entries with key index s <= query index t
    ti = jax.lax.broadcasted_iota(jnp.int32, (T, T), 0)  # query index t
    si = jax.lax.broadcasted_iota(jnp.int32, (T, T), 1)  # key index s
    keep = (si <= ti)[None, :, :]                        # (1, T, T)

    # TODO(synk): at production T/H, batch heads into one (B*H, T, T)
    # dot_general and switch to flash-style (tq, tk) tiling; at T = 8 a static
    # unroll over 4 heads inside a single invocation is cheaper than the
    # relayouts batching would require.
    head_outs = []
    for h in range(H):
        q = qkv[:, :, h * hs:(h + 1) * hs]                          # (B, T, hs)
        k = qkv[:, :, Hhs + h * hs:Hhs + (h + 1) * hs]              # (B, T, hs)
        v = qkv[:, :, 2 * Hhs + h * hs:2 * Hhs + (h + 1) * hs]      # (B, T, hs)

        # wei[b, t, s] = q[b, t, :] . k[b, s, :]  (t = query, s = key)
        wei = jnp.einsum("btd,bsd->bts", q, k,
                         preferred_element_type=jnp.float32) * scale
        wei = jnp.where(keep, wei, jnp.float32(-1e30))

        # softmax over dim=1 (the query axis), exactly as in the PyTorch module
        m = jnp.max(wei, axis=1, keepdims=True)            # (B, 1, T)
        e = jnp.exp(wei - m)
        e = jnp.where(keep, e, jnp.float32(0.0))            # masked entries -> exact 0
        denom = jnp.sum(e, axis=1, keepdims=True)           # (B, 1, T)
        p = e * pl.reciprocal(denom, approx=False)          # EUP, not VPU divide

        head_outs.append(jnp.einsum("bts,bsd->btd", p, v,
                                    preferred_element_type=jnp.float32))

    # Assemble the concatenated layout in registers; one full-width store.
    o_ref[...] = jnp.concatenate(head_outs, axis=-1).astype(o_ref.dtype)


def multi_head_attention(x, wq, wk, wv):
    """x: (B, T, C); wq/wk/wv: (H, C, hs). Returns (B, T, H*hs)."""
    B, T, C = x.shape
    H, _, hs = wq.shape

    # Stack per-head projection weights into ONE operand (C, 3*H*hs):
    # columns ordered [q_h0..q_h{H-1} | k_h0.. | v_h0..].
    w_qkv = jnp.concatenate(
        [jnp.transpose(wq, (1, 0, 2)).reshape(C, H * hs),
         jnp.transpose(wk, (1, 0, 2)).reshape(C, H * hs),
         jnp.transpose(wv, (1, 0, 2)).reshape(C, H * hs)],
        axis=-1,
    )

    kernel = functools.partial(_mha_kernel, num_heads=H, head_size=hs)

    # Everything fits in VMEM at these shapes -> single ungridded invocation,
    # whole arrays resident in VMEM.
    # TODO(synk): for realistic sequence lengths, switch to a flash-style
    # (tq, tk) grid with a 'parallel' batch/head axis and re-derive tile sizes
    # for v7x's 64 MiB VMEM.
    return pl.pallas_call(
        kernel,
        out_shape=jax.ShapeDtypeStruct((B, T, H * hs), x.dtype),
        in_specs=[pl.BlockSpec(memory_space=pltpu.MemorySpace.VMEM),
                  pl.BlockSpec(memory_space=pltpu.MemorySpace.VMEM)],
        out_specs=pl.BlockSpec(memory_space=pltpu.MemorySpace.VMEM),
    )(x, w_qkv)


def _reference(x, wq, wk, wv):
    """Pure-JAX transcription of the PyTorch forward for verification."""
    B, T, C = x.shape
    H = wq.shape[0]
    tril = jnp.tril(jnp.ones((T, T), dtype=x.dtype))
    outs = []
    for h in range(H):
        q = x @ wq[h]
        k = x @ wk[h]
        v = x @ wv[h]
        wei = q @ jnp.swapaxes(k, -2, -1) * C ** (-0.5)
        wei = jnp.where(tril[:T, :T] == 0, -jnp.inf, wei)
        wei = jax.nn.softmax(wei, axis=1)
        outs.append(wei @ v)
    return jnp.concatenate(outs, axis=-1)


if __name__ == "__main__":
    num_heads = 4
    head_size = n_embed // num_heads  # 8
    B, T, C = 2, block_size, n_embed  # (2, 8, 32)

    key = jax.random.PRNGKey(0)
    kx, kq, kk, kv = jax.random.split(key, 4)
    bound = 1.0 / (C ** 0.5)  # nn.Linear default init scale
    x = jax.random.normal(kx, (B, T, C), dtype=jnp.float32)
    wq = jax.random.uniform(kq, (num_heads, C, head_size), jnp.float32, -bound, bound)
    wk = jax.random.uniform(kk, (num_heads, C, head_size), jnp.float32, -bound, bound)
    wv = jax.random.uniform(kv, (num_heads, C, head_size), jnp.float32, -bound, bound)

    out = multi_head_attention(x, wq, wk, wv)
    out = jax.block_until_ready(out)

    ref = jax.block_until_ready(_reference(x, wq, wk, wv))
    np.testing.assert_allclose(np.asarray(out), np.asarray(ref), rtol=1e-5, atol=1e-5)
    assert out.shape == (B, T, num_heads * head_size)

    print("KERNEL_OK")
</pallas_src>

<mosaic_0001>
module attributes {stable_mosaic.version = 11 : i64} {
  func.func @_mha_kernel(%arg0: memref<2x8x32xf32, #tpu.memory_space<vmem>>, %arg1: memref<32x96xf32, #tpu.memory_space<vmem>>, %arg2: memref<2x8x32xf32, #tpu.memory_space<vmem>>) attributes {dimension_semantics = [], scalar_prefetch = 0 : i64, scratch_operands = 0 : i64, tpu.core_type = #tpu.core_type<tc>} {
    %c0 = arith.constant 0 : index
    %c0_0 = arith.constant 0 : index
    %c0_1 = arith.constant 0 : index
    %0 = vector.load %arg0[%c0, %c0_0, %c0_1] : memref<2x8x32xf32, #tpu.memory_space<vmem>>, vector<2x8x32xf32>
    %c0_2 = arith.constant 0 : index
    %c0_3 = arith.constant 0 : index
    %1 = vector.load %arg1[%c0_2, %c0_3] : memref<32x96xf32, #tpu.memory_space<vmem>>, vector<32x96xf32>
    %2 = vector.shape_cast %0 : vector<2x8x32xf32> to vector<16x32xf32>
    %cst = arith.constant dense<0.000000e+00> : vector<16x96xf32>
    %3 = tpu.matmul %2, %1, %cst {dimension_numbers = #tpu.dot_dimension_numbers<[1], [0], [0], [1], [0, 0, 1, 1], [], []>} : vector<16x32xf32>, vector<32x96xf32>, vector<16x96xf32> -> vector<16x96xf32>
    %4 = vector.shape_cast %3 : vector<16x96xf32> to vector<2x8x96xf32>
    %5 = tpu.iota {dimensions = array<i32: 0>} : vector<8x8xi32>
    %6 = tpu.iota {dimensions = array<i32: 1>} : vector<8x8xi32>
    %7 = arith.cmpi sle, %6, %5 : vector<8x8xi32>
    %8 = vector.shape_cast %7 : vector<8x8xi1> to vector<1x8x8xi1>
    %9 = vector.extract_strided_slice %4 {offsets = [0, 0, 0], sizes = [2, 8, 8], strides = [1, 1, 1]} : vector<2x8x96xf32> to vector<2x8x8xf32>
    %10 = vector.extract_strided_slice %4 {offsets = [0, 0, 32], sizes = [2, 8, 8], strides = [1, 1, 1]} : vector<2x8x96xf32> to vector<2x8x8xf32>
    %11 = vector.extract_strided_slice %4 {offsets = [0, 0, 64], sizes = [2, 8, 8], strides = [1, 1, 1]} : vector<2x8x96xf32> to vector<2x8x8xf32>
    "tpu.trace_start"() <{level = 10 : i32, message = "btd,bsd->bts"}> : () -> ()
    %cst_4 = arith.constant dense<0.000000e+00> : vector<2x8x8xf32>
    %12 = tpu.matmul %9, %10, %cst_4 {dimension_numbers = #tpu.dot_dimension_numbers<[2], [2], [1], [1], [0, 0, 0, 1, 1, 1], [0], [0]>} : vector<2x8x8xf32>, vector<2x8x8xf32>, vector<2x8x8xf32> -> vector<2x8x8xf32>
    "tpu.trace_stop"() : () -> ()
    %cst_5 = arith.constant 0.176776692 : f32
    %13 = vector.broadcast %cst_5 : f32 to vector<2x8x8xf32>
    %14 = arith.mulf %12, %13 : vector<2x8x8xf32>
    %cst_6 = arith.constant -1.000000e+30 : f32
    %15 = vector.shape_cast %8 : vector<1x8x8xi1> to vector<1x8x8xi1>
    %16 = vector.broadcast %15 : vector<1x8x8xi1> to vector<2x8x8xi1>
    %17 = vector.broadcast %cst_6 : f32 to vector<2x8x8xf32>
    %18 = arith.select %16, %14, %17 : vector<2x8x8xi1>, vector<2x8x8xf32>
    %cst_7 = arith.constant dense<0xFF800000> : vector<2x8xf32>
    %19 = vector.multi_reduction <maximumf>, %18, %cst_7 [1] : vector<2x8x8xf32> to vector<2x8xf32>
    %20 = vector.shape_cast %19 : vector<2x8xf32> to vector<2x1x8xf32>
    %21 = vector.broadcast %20 : vector<2x1x8xf32> to vector<2x8x8xf32>
    %22 = arith.subf %18, %21 : vector<2x8x8xf32>
    %23 = math.exp %22 : vector<2x8x8xf32>
    %cst_8 = arith.constant 0.000000e+00 : f32
    %24 = vector.shape_cast %8 : vector<1x8x8xi1> to vector<1x8x8xi1>
    %25 = vector.broadcast %24 : vector<1x8x8xi1> to vector<2x8x8xi1>
    %26 = vector.broadcast %cst_8 : f32 to vector<2x8x8xf32>
    %27 = arith.select %25, %23, %26 : vector<2x8x8xi1>, vector<2x8x8xf32>
    %cst_9 = arith.constant dense<0.000000e+00> : vector<2x8xf32>
    %28 = vector.multi_reduction <add>, %27, %cst_9 [1] : vector<2x8x8xf32> to vector<2x8xf32>
    %29 = vector.shape_cast %28 : vector<2x8xf32> to vector<2x1x8xf32>
    %30 = tpu.reciprocal %29 : vector<2x1x8xf32> -> vector<2x1x8xf32>
    %31 = vector.broadcast %30 : vector<2x1x8xf32> to vector<2x8x8xf32>
    %32 = arith.mulf %27, %31 : vector<2x8x8xf32>
    "tpu.trace_start"() <{level = 10 : i32, message = "bts,bsd->btd"}> : () -> ()
    %cst_10 = arith.constant dense<0.000000e+00> : vector<2x8x8xf32>
    %33 = tpu.matmul %32, %11, %cst_10 {dimension_numbers = #tpu.dot_dimension_numbers<[2], [1], [1], [2], [0, 0, 0, 1, 1, 2], [0], [0]>} : vector<2x8x8xf32>, vector<2x8x8xf32>, vector<2x8x8xf32> -> vector<2x8x8xf32>
    "tpu.trace_stop"() : () -> ()
    %34 = vector.extract_strided_slice %4 {offsets = [0, 0, 8], sizes = [2, 8, 8], strides = [1, 1, 1]} : vector<2x8x96xf32> to vector<2x8x8xf32>
    %35 = vector.extract_strided_slice %4 {offsets = [0, 0, 40], sizes = [2, 8, 8], strides = [1, 1, 1]} : vector<2x8x96xf32> to vector<2x8x8xf32>
    %36 = vector.extract_strided_slice %4 {offsets = [0, 0, 72], sizes = [2, 8, 8], strides = [1, 1, 1]} : vector<2x8x96xf32> to vector<2x8x8xf32>
    "tpu.trace_start"() <{level = 10 : i32, message = "btd,bsd->bts"}> : () -> ()
    %cst_11 = arith.constant dense<0.000000e+00> : vector<2x8x8xf32>
    %37 = tpu.matmul %34, %35, %cst_11 {dimension_numbers = #tpu.dot_dimension_numbers<[2], [2], [1], [1], [0, 0, 0, 1, 1, 1], [0], [0]>} : vector<2x8x8xf32>, vector<2x8x8xf32>, vector<2x8x8xf32> -> vector<2x8x8xf32>
    "tpu.trace_stop"() : () -> ()
    %cst_12 = arith.constant 0.176776692 : f32
    %38 = vector.broadcast %cst_12 : f32 to vector<2x8x8xf32>
    %39 = arith.mulf %37, %38 : vector<2x8x8xf32>
    %cst_13 = arith.constant -1.000000e+30 : f32
    %40 = vector.shape_cast %8 : vector<1x8x8xi1> to vector<1x8x8xi1>
    %41 = vector.broadcast %40 : vector<1x8x8xi1> to vector<2x8x8xi1>
    %42 = vector.broadcast %cst_13 : f32 to vector<2x8x8xf32>
    %43 = arith.select %41, %39, %42 : vector<2x8x8xi1>, vector<2x8x8xf32>
    %cst_14 = arith.constant dense<0xFF800000> : vector<2x8xf32>
    %44 = vector.multi_reduction <maximumf>, %43, %cst_14 [1] : vector<2x8x8xf32> to vector<2x8xf32>
    %45 = vector.shape_cast %44 : vector<2x8xf32> to vector<2x1x8xf32>
    %46 = vector.broadcast %45 : vector<2x1x8xf32> to vector<2x8x8xf32>
    %47 = arith.subf %43, %46 : vector<2x8x8xf32>
    %48 = math.exp %47 : vector<2x8x8xf32>
    %cst_15 = arith.constant 0.000000e+00 : f32
    %49 = vector.shape_cast %8 : vector<1x8x8xi1> to vector<1x8x8xi1>
    %50 = vector.broadcast %49 : vector<1x8x8xi1> to vector<2x8x8xi1>
    %51 = vector.broadcast %cst_15 : f32 to vector<2x8x8xf32>
    %52 = arith.select %50, %48, %51 : vector<2x8x8xi1>, vector<2x8x8xf32>
    %cst_16 = arith.constant dense<0.000000e+00> : vector<2x8xf32>
    %53 = vector.multi_reduction <add>, %52, %cst_16 [1] : vector<2x8x8xf32> to vector<2x8xf32>
    %54 = vector.shape_cast %53 : vector<2x8xf32> to vector<2x1x8xf32>
    %55 = tpu.reciprocal %54 : vector<2x1x8xf32> -> vector<2x1x8xf32>
    %56 = vector.broadcast %55 : vector<2x1x8xf32> to vector<2x8x8xf32>
    %57 = arith.mulf %52, %56 : vector<2x8x8xf32>
    "tpu.trace_start"() <{level = 10 : i32, message = "bts,bsd->btd"}> : () -> ()
    %cst_17 = arith.constant dense<0.000000e+00> : vector<2x8x8xf32>
    %58 = tpu.matmul %57, %36, %cst_17 {dimension_numbers = #tpu.dot_dimension_numbers<[2], [1], [1], [2], [0, 0, 0, 1, 1, 2], [0], [0]>} : vector<2x8x8xf32>, vector<2x8x8xf32>, vector<2x8x8xf32> -> vector<2x8x8xf32>
    "tpu.trace_stop"() : () -> ()
    %59 = vector.extract_strided_slice %4 {offsets = [0, 0, 16], sizes = [2, 8, 8], strides = [1, 1, 1]} : vector<2x8x96xf32> to vector<2x8x8xf32>
    %60 = vector.extract_strided_slice %4 {offsets = [0, 0, 48], sizes = [2, 8, 8], strides = [1, 1, 1]} : vector<2x8x96xf32> to vector<2x8x8xf32>
    %61 = vector.extract_strided_slice %4 {offsets = [0, 0, 80], sizes = [2, 8, 8], strides = [1, 1, 1]} : vector<2x8x96xf32> to vector<2x8x8xf32>
    "tpu.trace_start"() <{level = 10 : i32, message = "btd,bsd->bts"}> : () -> ()
    %cst_18 = arith.constant dense<0.000000e+00> : vector<2x8x8xf32>
    %62 = tpu.matmul %59, %60, %cst_18 {dimension_numbers = #tpu.dot_dimension_numbers<[2], [2], [1], [1], [0, 0, 0, 1, 1, 1], [0], [0]>} : vector<2x8x8xf32>, vector<2x8x8xf32>, vector<2x8x8xf32> -> vector<2x8x8xf32>
    "tpu.trace_stop"() : () -> ()
    %cst_19 = arith.constant 0.176776692 : f32
    %63 = vector.broadcast %cst_19 : f32 to vector<2x8x8xf32>
    %64 = arith.mulf %62, %63 : vector<2x8x8xf32>
    %cst_20 = arith.constant -1.000000e+30 : f32
    %65 = vector.shape_cast %8 : vector<1x8x8xi1> to vector<1x8x8xi1>
    %66 = vector.broadcast %65 : vector<1x8x8xi1> to vector<2x8x8xi1>
    %67 = vector.broadcast %cst_20 : f32 to vector<2x8x8xf32>
    %68 = arith.select %66, %64, %67 : vector<2x8x8xi1>, vector<2x8x8xf32>
    %cst_21 = arith.constant dense<0xFF800000> : vector<2x8xf32>
    %69 = vector.multi_reduction <maximumf>, %68, %cst_21 [1] : vector<2x8x8xf32> to vector<2x8xf32>
    %70 = vector.shape_cast %69 : vector<2x8xf32> to vector<2x1x8xf32>
    %71 = vector.broadcast %70 : vector<2x1x8xf32> to vector<2x8x8xf32>
    %72 = arith.subf %68, %71 : vector<2x8x8xf32>
    %73 = math.exp %72 : vector<2x8x8xf32>
    %cst_22 = arith.constant 0.000000e+00 : f32
    %74 = vector.shape_cast %8 : vector<1x8x8xi1> to vector<1x8x8xi1>
    %75 = vector.broadcast %74 : vector<1x8x8xi1> to vector<2x8x8xi1>
    %76 = vector.broadcast %cst_22 : f32 to vector<2x8x8xf32>
    %77 = arith.select %75, %73, %76 : vector<2x8x8xi1>, vector<2x8x8xf32>
    %cst_23 = arith.constant dense<0.000000e+00> : vector<2x8xf32>
    %78 = vector.multi_reduction <add>, %77, %cst_23 [1] : vector<2x8x8xf32> to vector<2x8xf32>
    %79 = vector.shape_cast %78 : vector<2x8xf32> to vector<2x1x8xf32>
    %80 = tpu.reciprocal %79 : vector<2x1x8xf32> -> vector<2x1x8xf32>
    %81 = vector.broadcast %80 : vector<2x1x8xf32> to vector<2x8x8xf32>
    %82 = arith.mulf %77, %81 : vector<2x8x8xf32>
    "tpu.trace_start"() <{level = 10 : i32, message = "bts,bsd->btd"}> : () -> ()
    %cst_24 = arith.constant dense<0.000000e+00> : vector<2x8x8xf32>
    %83 = tpu.matmul %82, %61, %cst_24 {dimension_numbers = #tpu.dot_dimension_numbers<[2], [1], [1], [2], [0, 0, 0, 1, 1, 2], [0], [0]>} : vector<2x8x8xf32>, vector<2x8x8xf32>, vector<2x8x8xf32> -> vector<2x8x8xf32>
    "tpu.trace_stop"() : () -> ()
    %84 = vector.extract_strided_slice %4 {offsets = [0, 0, 24], sizes = [2, 8, 8], strides = [1, 1, 1]} : vector<2x8x96xf32> to vector<2x8x8xf32>
    %85 = vector.extract_strided_slice %4 {offsets = [0, 0, 56], sizes = [2, 8, 8], strides = [1, 1, 1]} : vector<2x8x96xf32> to vector<2x8x8xf32>
    %86 = vector.extract_strided_slice %4 {offsets = [0, 0, 88], sizes = [2, 8, 8], strides = [1, 1, 1]} : vector<2x8x96xf32> to vector<2x8x8xf32>
    "tpu.trace_start"() <{level = 10 : i32, message = "btd,bsd->bts"}> : () -> ()
    %cst_25 = arith.constant dense<0.000000e+00> : vector<2x8x8xf32>
    %87 = tpu.matmul %84, %85, %cst_25 {dimension_numbers = #tpu.dot_dimension_numbers<[2], [2], [1], [1], [0, 0, 0, 1, 1, 1], [0], [0]>} : vector<2x8x8xf32>, vector<2x8x8xf32>, vector<2x8x8xf32> -> vector<2x8x8xf32>
    "tpu.trace_stop"() : () -> ()
    %cst_26 = arith.constant 0.176776692 : f32
    %88 = vector.broadcast %cst_26 : f32 to vector<2x8x8xf32>
    %89 = arith.mulf %87, %88 : vector<2x8x8xf32>
    %cst_27 = arith.constant -1.000000e+30 : f32
    %90 = vector.shape_cast %8 : vector<1x8x8xi1> to vector<1x8x8xi1>
    %91 = vector.broadcast %90 : vector<1x8x8xi1> to vector<2x8x8xi1>
    %92 = vector.broadcast %cst_27 : f32 to vector<2x8x8xf32>
    %93 = arith.select %91, %89, %92 : vector<2x8x8xi1>, vector<2x8x8xf32>
    %cst_28 = arith.constant dense<0xFF800000> : vector<2x8xf32>
    %94 = vector.multi_reduction <maximumf>, %93, %cst_28 [1] : vector<2x8x8xf32> to vector<2x8xf32>
    %95 = vector.shape_cast %94 : vector<2x8xf32> to vector<2x1x8xf32>
    %96 = vector.broadcast %95 : vector<2x1x8xf32> to vector<2x8x8xf32>
    %97 = arith.subf %93, %96 : vector<2x8x8xf32>
    %98 = math.exp %97 : vector<2x8x8xf32>
    %cst_29 = arith.constant 0.000000e+00 : f32
    %99 = vector.shape_cast %8 : vector<1x8x8xi1> to vector<1x8x8xi1>
    %100 = vector.broadcast %99 : vector<1x8x8xi1> to vector<2x8x8xi1>
    %101 = vector.broadcast %cst_29 : f32 to vector<2x8x8xf32>
    %102 = arith.select %100, %98, %101 : vector<2x8x8xi1>, vector<2x8x8xf32>
    %cst_30 = arith.constant dense<0.000000e+00> : vector<2x8xf32>
    %103 = vector.multi_reduction <add>, %102, %cst_30 [1] : vector<2x8x8xf32> to vector<2x8xf32>
    %104 = vector.shape_cast %103 : vector<2x8xf32> to vector<2x1x8xf32>
    %105 = tpu.reciprocal %104 : vector<2x1x8xf32> -> vector<2x1x8xf32>
    %106 = vector.broadcast %105 : vector<2x1x8xf32> to vector<2x8x8xf32>
    %107 = arith.mulf %102, %106 : vector<2x8x8xf32>
    "tpu.trace_start"() <{level = 10 : i32, message = "bts,bsd->btd"}> : () -> ()
    %cst_31 = arith.constant dense<0.000000e+00> : vector<2x8x8xf32>
    %108 = tpu.matmul %107, %86, %cst_31 {dimension_numbers = #tpu.dot_dimension_numbers<[2], [1], [1], [2], [0, 0, 0, 1, 1, 2], [0], [0]>} : vector<2x8x8xf32>, vector<2x8x8xf32>, vector<2x8x8xf32> -> vector<2x8x8xf32>
    "tpu.trace_stop"() : () -> ()
    %109 = tpu.concatenate %33, %58, %83, %108 in 2 : vector<2x8x8xf32>, vector<2x8x8xf32>, vector<2x8x8xf32>, vector<2x8x8xf32> -> vector<2x8x32xf32>
    %c0_32 = arith.constant 0 : index
    %c0_33 = arith.constant 0 : index
    %c0_34 = arith.constant 0 : index
    %110 = vector.load %arg2[%c0_32, %c0_33, %c0_34] : memref<2x8x32xf32, #tpu.memory_space<vmem>>, vector<2x8x32xf32>
    tpu.vector_store %arg2[%c0_32, %c0_33, %c0_34], %109 {strides = array<i32>} : memref<2x8x32xf32, #tpu.memory_space<vmem>>, vector<2x8x32xf32>,
    return
  }
}

</mosaic_0001>

<llo_original>
// kernel: tpu_custom_call.1
$region0: #{tpu_custom_call.1}
  #allocation0 [shape = 'u32[]', space=smem, size = 0x4, offset = 0x4, fixed_abs, tag = 'smem constant byte address 0x4 - core index']
  #allocation1 [shape = 'u32[144,128]{1,0:T(1,128)}', space=vmem, size = 0x12000, scoped, tag = 'internal scratch']
  %s0 = inlined_call_operand.hbm [shape: f32[2,8,32], index: 0, kind: input, shape index: {}]
  %s1 = inlined_call_operand.hbm [shape: f32[32,96], index: 1, kind: input, shape index: {}]
  %s2 = inlined_call_operand.hbm [shape: f32[2,8,32], index: 2, kind: output, shape index: {}]
  %s3 = sld [smem:[#allocation0]]
  $region26: #{tpu_custom_call.1} parent=0
    _
  %s5 = ssub.s32 1, %s3
  %s6 = scalar_select 0, %s5, %s3
  $region1: #{tpu_custom_call.1} parent=0
    #allocation2 [shape = 'u8[8192]{0}', space=vmem, size = 0x2000, scoped, tag = 'input window, operand 0, single buffered']
    #allocation3 [shape = 's32[1]{0}', space=sflag, size = 0x4, scoped, tag = 'scoped memory for tpu_custom_call.1']
    #allocation4 [shape = 's32[1]{0}', space=sflag, size = 0x4, scoped, tag = 'scoped memory for tpu_custom_call.1']
    #allocation5 [shape = 'u8[16384]{0}', space=vmem, size = 0x4000, scoped, tag = 'input window, operand 1, single buffered']
    #allocation6 [shape = 's32[1]{0}', space=sflag, size = 0x4, scoped, tag = 'scoped memory for tpu_custom_call.1']
    #allocation7 [shape = 'u8[8192]{0}', space=vmem, size = 0x2000, scoped, tag = 'output window, operand 0, single buffered']
    %7 = vsyncpa [#allocation3], 0
    %8 = vsyncpa [#allocation6], 0
    %9 = vsyncpa [#allocation4], 0
    // Predicated region
    $region2: #{tpu_custom_call.1} parent=1 // pred_check
      _
    $region3: #{tpu_custom_call.1} parent=1 // pred_check_branch
      %11 = sbr.rel (0) target = $region5
    $region4: #{tpu_custom_call.1} parent=1 // pred_region
      %s13 = ssub.s32 256, 256
      %14 = vsyncadd [#allocation3], %s13
      %s15 = sshll.u32 [#allocation2], 4
      %s16 = int_to_ptr.vmem [resolvable:$true] %s15
      %21 = dma.hbm_to_vmem [thread:$0]  %s0, 256, %s16, [#allocation3], 128, 128, 8
    $region5: #{tpu_custom_call.1} parent=1 // pred_fallthru
      _
    // Predicated region
    $region6: #{tpu_custom_call.1} parent=1 // pred_check
      _
    $region7: #{tpu_custom_call.1} parent=1 // pred_check_branch
      %23 = sbr.rel (0) target = $region9
    $region8: #{tpu_custom_call.1} parent=1 // pred_region
      %s25 = ssub.s32 512, 512
      %26 = vsyncadd [#allocation6], %s25
      %s27 = sshll.u32 [#allocation5], 4
      %s28 = int_to_ptr.vmem [resolvable:$true] %s27
      %33 = dma.hbm_to_vmem [thread:$0]  %s1, 512, %s28, [#allocation6], 128, 128, 8
    $region9: #{tpu_custom_call.1} parent=1 // pred_fallthru
      _
    // Predicated region
    $region10: #{tpu_custom_call.1} parent=1 // pred_check
      _
    $region11: #{tpu_custom_call.1} parent=1 // pred_check_branch
      %35 = sbr.rel (0) target = $region13
    $region12: #{tpu_custom_call.1} parent=1 // pred_region
      %36 = dma.done [#allocation3], 256
    $region13: #{tpu_custom_call.1} parent=1 // pred_fallthru
      _
    // Predicated region
    $region14: #{tpu_custom_call.1} parent=1 // pred_check
      _
    $region15: #{tpu_custom_call.1} parent=1 // pred_check_branch
      %38 = sbr.rel (0) target = $region17
    $region16: #{tpu_custom_call.1} parent=1 // pred_region
      %39 = dma.done [#allocation6], 512
    $region17: #{tpu_custom_call.1} parent=1 // pred_fallthru
      _
    %v40 = vld [vmem:[#allocation2] sm:$0xff]
    %v41 = vld [vmem:[#allocation2 + $0x8] sm:$0xff]
    %v42 = vld [vmem:[#allocation5] sm:$0xff]
    %v43 = vld [vmem:[#allocation5 + $0x8] sm:$0xff]
    %v44 = vld [vmem:[#allocation5 + $0x10] sm:$0xff]
    %v45 = vld [vmem:[#allocation5 + $0x18] sm:$0xff]
    %vm46 = vcmask 261120
    %v48 = vsel %vm46, %v40, 0
    %v51 = vsel %vm46, %v41, 0
    %53 = vmatprep.subr.mxu0 0.0
    %54 = vmatpush1.msra.mxu0 %v42
    %55 = vmatprep.subr.mxu0 0.0
    %56 = vmatpush1.msra.mxu0 %v43
    %57 = vmatprep.subr.mxu0 0.0
    %58 = vmatpush1.msra.mxu0 %v44
    %59 = vmatprep.subr.mxu0 0.0
    %60 = vmatpush1.msra.mxu0 %v45
    %61 = vmatprep.subr.mxu0 0.0
    %62 = vmatpush1.msra.mxu0 0.0
    %63 = vmatprep.subr.mxu0 0.0
    %64 = vmatpush1.msra.mxu0 0.0
    %65 = vmatprep.subr.mxu0 0.0
    %66 = vmatpush1.msra.mxu0 0.0
    %67 = vmatprep.subr.mxu0 0.0
    %68 = vmatpush1.msra.mxu0 0.0
    %69 = vmatprep.subr.mxu0 0.0
    %70 = vmatpush1.msra.mxu0 0.0
    %71 = vmatprep.subr.mxu0 0.0
    %72 = vmatpush1.msra.mxu0 0.0
    %73 = vmatprep.subr.mxu0 0.0
    %74 = vmatpush1.msra.mxu0 0.0
    %75 = vmatprep.subr.mxu0 0.0
    %76 = vmatpush1.msra.mxu0 0.0
    %77 = vmatprep.subr.mxu0 0.0
    %78 = vmatpush1.msra.mxu0 0.0
    %79 = vmatprep.subr.mxu0 0.0
    %80 = vmatpush1.msra.mxu0 0.0
    %81 = vmatprep.subr.mxu0 0.0
    %82 = vmatpush1.msra.mxu0 0.0
    %83 = vmatprep.subr.mxu0 0.0
    %84 = vmatpush1.msra.mxu0 0.0
    %85 = vmatprep.subr.mxu0 0.0
    %86 = vmatpush1.msra.mxu0 0.0
    %87 = vmatprep.subr.mxu0 0.0
    %88 = vmatpush1.msra.mxu0 0.0
    %89 = vmatprep.subr.mxu0 0.0
    %90 = vmatpush1.msra.mxu0 0.0
    %91 = vmatprep.subr.mxu0 0.0
    %92 = vmatpush1.msra.mxu0 0.0
    %93 = vmatprep.subr.mxu0 0.0
    %94 = vmatpush1.msra.mxu0 0.0
    %95 = vmatprep.subr.mxu0 0.0
    %96 = vmatpush1.msra.mxu0 0.0
    %97 = vmatprep.subr.mxu0 0.0
    %98 = vmatpush1.msra.mxu0 0.0
    %99 = vmatprep.subr.mxu0 0.0
    %100 = vmatpush1.msra.mxu0 0.0
    %101 = vmatprep.subr.mxu0 0.0
    %102 = vmatpush1.msra.mxu0 0.0
    %103 = vmatprep.subr.mxu0 0.0
    %104 = vmatpush1.msra.mxu0 0.0
    %105 = vmatprep.subr.mxu0 0.0
    %106 = vmatpush1.msra.mxu0 0.0
    %107 = vmatprep.subr.mxu0 0.0
    %108 = vmatpush1.msra.mxu0 0.0
    %109 = vmatprep.subr.mxu0 0.0
    %110 = vmatpush1.msra.mxu0 0.0
    %111 = vmatprep.subr.mxu0 0.0
    %112 = vmatpush1.msra.mxu0 0.0
    %113 = vmatprep.subr.mxu0 0.0
    %114 = vmatpush1.msra.mxu0 0.0
    %115 = vmatprep.subr.mxu0 0.0
    %116 = vmatpush1.msra.mxu0 0.0
    %117 = vmatprep.mubr.f32.mxu0 0.0
    %118 = vmatmul.mubr.f32.gmra.mrb[0].mxu0 %v48
    %v119 = vpop.f32.mrb[0].mxu0
    %v120 = vadd.f32 0.0, %v119
    %v121 = vpop.f32.mrb[0].mxu0
    %122 = vmatprep.mubr.f32.mxu0 0.0
    %123 = vmatmul.mubr.f32.gmra.mrb[0].mxu0 %v51
    %v124 = vpop.f32.mrb[0].mxu0
    %v125 = vadd.f32 0.0, %v124
    %v126 = vpop.f32.mrb[0].mxu0
    %127 = vdwg.mxu0
    %v128 = vlaneseq
    %v129 = vshrl.u32 %v128, 7
    %v130 = vlaneseq
    %v131 = vand.u32 %v130, 127
    %vm132 = vcmp.le.s32.totalorder %v131, %v129
    %134 = vrot.lane.b32.xlu0 %v120, 96
    %v135 = vpop.permute.xlu0 %134
    %vm136 = vcmask 64512
    %v137 = vsel %vm136, %v120, 0
    %v139 = vsel %vm136, %v135, 0
    %141 = vmatprep.subr.mxu0 0.0
    %142 = vmatpush1.xpose.msra.mxu0 %v139
    %143 = vmatprep.subr.mxu0 0.0
    %144 = vmatpush1.xpose.msra.mxu0 0.0
    %145 = vmatprep.subr.mxu0 0.0
    %146 = vmatpush1.xpose.msra.mxu0 0.0
    %147 = vmatprep.subr.mxu0 0.0
    %148 = vmatpush1.xpose.msra.mxu0 0.0
    %149 = vmatprep.subr.mxu0 0.0
    %150 = vmatpush1.xpose.msra.mxu0 0.0
    %151 = vmatprep.subr.mxu0 0.0
    %152 = vmatpush1.xpose.msra.mxu0 0.0
    %153 = vmatprep.subr.mxu0 0.0
    %154 = vmatpush1.xpose.msra.mxu0 0.0
    %155 = vmatprep.subr.mxu0 0.0
    %156 = vmatpush1.xpose.msra.mxu0 0.0
    %157 = vmatprep.subr.mxu0 0.0
    %158 = vmatpush1.xpose.msra.mxu0 0.0
    %159 = vmatprep.subr.mxu0 0.0
    %160 = vmatpush1.xpose.msra.mxu0 0.0
    %161 = vmatprep.subr.mxu0 0.0
    %162 = vmatpush1.xpose.msra.mxu0 0.0
    %163 = vmatprep.subr.mxu0 0.0
    %164 = vmatpush1.xpose.msra.mxu0 0.0
    %165 = vmatprep.subr.mxu0 0.0
    %166 = vmatpush1.xpose.msra.mxu0 0.0
    %167 = vmatprep.subr.mxu0 0.0
    %168 = vmatpush1.xpose.msra.mxu0 0.0
    %169 = vmatprep.subr.mxu0 0.0
    %170 = vmatpush1.xpose.msra.mxu0 0.0
    %171 = vmatprep.subr.mxu0 0.0
    %172 = vmatpush1.xpose.msra.mxu0 0.0
    %173 = vmatprep.subr.mxu0 0.0
    %174 = vmatpush1.xpose.msra.mxu0 0.0
    %175 = vmatprep.subr.mxu0 0.0
    %176 = vmatpush1.xpose.msra.mxu0 0.0
    %177 = vmatprep.subr.mxu0 0.0
    %178 = vmatpush1.xpose.msra.mxu0 0.0
    %179 = vmatprep.subr.mxu0 0.0
    %180 = vmatpush1.xpose.msra.mxu0 0.0
    %181 = vmatprep.subr.mxu0 0.0
    %182 = vmatpush1.xpose.msra.mxu0 0.0
    %183 = vmatprep.subr.mxu0 0.0
    %184 = vmatpush1.xpose.msra.mxu0 0.0
    %185 = vmatprep.subr.mxu0 0.0
    %186 = vmatpush1.xpose.msra.mxu0 0.0
    %187 = vmatprep.subr.mxu0 0.0
    %188 = vmatpush1.xpose.msra.mxu0 0.0
    %189 = vmatprep.subr.mxu0 0.0
    %190 = vmatpush1.xpose.msra.mxu0 0.0
    %191 = vmatprep.subr.mxu0 0.0
    %192 = vmatpush1.xpose.msra.mxu0 0.0
    %193 = vmatprep.subr.mxu0 0.0
    %194 = vmatpush1.xpose.msra.mxu0 0.0
    %195 = vmatprep.subr.mxu0 0.0
    %196 = vmatpush1.xpose.msra.mxu0 0.0
    %197 = vmatprep.subr.mxu0 0.0
    %198 = vmatpush1.xpose.msra.mxu0 0.0
    %199 = vmatprep.subr.mxu0 0.0
    %200 = vmatpush1.xpose.msra.mxu0 0.0
    %201 = vmatprep.subr.mxu0 0.0
    %202 = vmatpush1.xpose.msra.mxu0 0.0
    %203 = vmatprep.subr.mxu0 0.0
    %204 = vmatpush1.xpose.msra.mxu0 0.0
    %205 = vmatprep.mubr.f32.mxu0 0.0
    %206 = vmatmul.mubr.f32.gmra.mrb[0].mxu0 %v137
    %v207 = vpop.f32.mrb[0].mxu0
    %v208 = vadd.f32 0.0, %v207
    %v209 = vpop.f32.mrb[0].mxu0
    %210 = vdwg.mxu0
    %212 = vrot.lane.b32.xlu0 %v125, 96
    %v213 = vpop.permute.xlu0 %212
    %v214 = vsel %vm136, %v125, 0
    %v216 = vsel %vm136, %v213, 0
    %218 = vmatprep.subr.mxu0 0.0
    %219 = vmatpush1.xpose.msra.mxu0 %v216
    %220 = vmatprep.subr.mxu0 0.0
    %221 = vmatpush1.xpose.msra.mxu0 0.0
    %222 = vmatprep.subr.mxu0 0.0
    %223 = vmatpush1.xpose.msra.mxu0 0.0
    %224 = vmatprep.subr.mxu0 0.0
    %225 = vmatpush1.xpose.msra.mxu0 0.0
    %226 = vmatprep.subr.mxu0 0.0
    %227 = vmatpush1.xpose.msra.mxu0 0.0
    %228 = vmatprep.subr.mxu0 0.0
    %229 = vmatpush1.xpose.msra.mxu0 0.0
    %230 = vmatprep.subr.mxu0 0.0
    %231 = vmatpush1.xpose.msra.mxu0 0.0
    %232 = vmatprep.subr.mxu0 0.0
    %233 = vmatpush1.xpose.msra.mxu0 0.0
    %234 = vmatprep.subr.mxu0 0.0
    %235 = vmatpush1.xpose.msra.mxu0 0.0
    %236 = vmatprep.subr.mxu0 0.0
    %237 = vmatpush1.xpose.msra.mxu0 0.0
    %238 = vmatprep.subr.mxu0 0.0
    %239 = vmatpush1.xpose.msra.mxu0 0.0
    %240 = vmatprep.subr.mxu0 0.0
    %241 = vmatpush1.xpose.msra.mxu0 0.0
    %242 = vmatprep.subr.mxu0 0.0
    %243 = vmatpush1.xpose.msra.mxu0 0.0
    %244 = vmatprep.subr.mxu0 0.0
    %245 = vmatpush1.xpose.msra.mxu0 0.0
    %246 = vmatprep.subr.mxu0 0.0
    %247 = vmatpush1.xpose.msra.mxu0 0.0
    %248 = vmatprep.subr.mxu0 0.0
    %249 = vmatpush1.xpose.msra.mxu0 0.0
    %250 = vmatprep.subr.mxu0 0.0
    %251 = vmatpush1.xpose.msra.mxu0 0.0
    %252 = vmatprep.subr.mxu0 0.0
    %253 = vmatpush1.xpose.msra.mxu0 0.0
    %254 = vmatprep.subr.mxu0 0.0
    %255 = vmatpush1.xpose.msra.mxu0 0.0
    %256 = vmatprep.subr.mxu0 0.0
    %257 = vmatpush1.xpose.msra.mxu0 0.0
    %258 = vmatprep.subr.mxu0 0.0
    %259 = vmatpush1.xpose.msra.mxu0 0.0
    %260 = vmatprep.subr.mxu0 0.0
    %261 = vmatpush1.xpose.msra.mxu0 0.0
    %262 = vmatprep.subr.mxu0 0.0
    %263 = vmatpush1.xpose.msra.mxu0 0.0
    %264 = vmatprep.subr.mxu0 0.0
    %265 = vmatpush1.xpose.msra.mxu0 0.0
    %266 = vmatprep.subr.mxu0 0.0
    %267 = vmatpush1.xpose.msra.mxu0 0.0
    %268 = vmatprep.subr.mxu0 0.0
    %269 = vmatpush1.xpose.msra.mxu0 0.0
    %270 = vmatprep.subr.mxu0 0.0
    %271 = vmatpush1.xpose.msra.mxu0 0.0
    %272 = vmatprep.subr.mxu0 0.0
    %273 = vmatpush1.xpose.msra.mxu0 0.0
    %274 = vmatprep.subr.mxu0 0.0
    %275 = vmatpush1.xpose.msra.mxu0 0.0
    %276 = vmatprep.subr.mxu0 0.0
    %277 = vmatpush1.xpose.msra.mxu0 0.0
    %278 = vmatprep.subr.mxu0 0.0
    %279 = vmatpush1.xpose.msra.mxu0 0.0
    %280 = vmatprep.subr.mxu0 0.0
    %281 = vmatpush1.xpose.msra.mxu0 0.0
    %282 = vmatprep.mubr.f32.mxu0 0.0
    %283 = vmatmul.mubr.f32.gmra.mrb[0].mxu0 %v214
    %v284 = vpop.f32.mrb[0].mxu0
    %v285 = vadd.f32 0.0, %v284
    %v286 = vpop.f32.mrb[0].mxu0
    %287 = vdwg.mxu0
    %v288 = vmul.f32 %v208, 0.17677669
    %v289 = vmul.f32 %v285, 0.17677669
    %v290 = vsel %vm132, 1, 0
    %vm291 = vcmp.eq.s32.totalorder %v290, 1
    %v292 = vsel %vm291, %v288, -1e+30
    %v293 = vsel %vm291, %v289, -1e+30
    %v294 = vsel %vm136, %v292, -inf
    %v295 = vrot.slane %v294, 4
    %v296 = vmax.f32 %v294, %v295
    %v297 = vrot.slane %v296, 2
    %v298 = vmax.f32 %v296, %v297
    %v299 = vrot.slane %v298, 1
    %v300 = vmax.f32 %v298, %v299
    %v301 = vsel %vm136, %v293, -inf
    %v302 = vrot.slane %v301, 4
    %v303 = vmax.f32 %v301, %v302
    %v304 = vrot.slane %v303, 2
    %v305 = vmax.f32 %v303, %v304
    %v306 = vrot.slane %v305, 1
    %v307 = vmax.f32 %v305, %v306
    %v308 = vsub.f32 %v292, %v300
    %v309 = vsub.f32 %v293, %v307
    %v310 = vmul.f32 %v308, 1.442695
    %v311 = vpow.pop %v310
    %v312 = vmul.f32 %v309, 1.442695
    %v313 = vpow.pop %v312
    %v314 = vsel %vm291, %v311, 0.0
    %v315 = vsel %vm291, %v313, 0.0
    %v316 = vsel %vm136, %v314, 0.0
    %v317 = vrot.slane %v316, 4
    %v318 = vadd.f32 %v316, %v317
    %v319 = vrot.slane %v318, 2
    %v320 = vadd.f32 %v318, %v319
    %v321 = vrot.slane %v320, 1
    %v322 = vadd.f32 %v320, %v321
    %v323 = vsel %vm136, %v315, 0.0
    %v324 = vrot.slane %v323, 4
    %v325 = vadd.f32 %v323, %v324
    %v326 = vrot.slane %v325, 2
    %v327 = vadd.f32 %v325, %v326
    %v328 = vrot.slane %v327, 1
    %v329 = vadd.f32 %v327, %v328
    %v330 = vrcp.pop %v322
    %v331 = vrcp.pop %v329
    %v332 = vmul.f32 %v314, %v330
    %v333 = vmul.f32 %v315, %v331
    %334 = vrot.lane.b32.xlu0 %v120, 64
    %v335 = vpop.permute.xlu0 %334
    %v338 = vsel %vm136, %v332, 0
    %340 = vmatprep.subr.mxu0 0.0
    %341 = vmatpush1.msra.mxu0 %v335
    %342 = vmatprep.subr.mxu0 0.0
    %343 = vmatpush1.msra.mxu0 0.0
    %344 = vmatprep.subr.mxu0 0.0
    %345 = vmatpush1.msra.mxu0 0.0
    %346 = vmatprep.subr.mxu0 0.0
    %347 = vmatpush1.msra.mxu0 0.0
    %348 = vmatprep.subr.mxu0 0.0
    %349 = vmatpush1.msra.mxu0 0.0
    %350 = vmatprep.subr.mxu0 0.0
    %351 = vmatpush1.msra.mxu0 0.0
    %352 = vmatprep.subr.mxu0 0.0
    %353 = vmatpush1.msra.mxu0 0.0
    %354 = vmatprep.subr.mxu0 0.0
    %355 = vmatpush1.msra.mxu0 0.0
    %356 = vmatprep.subr.mxu0 0.0
    %357 = vmatpush1.msra.mxu0 0.0
    %358 = vmatprep.subr.mxu0 0.0
    %359 = vmatpush1.msra.mxu0 0.0
    %360 = vmatprep.subr.mxu0 0.0
    %361 = vmatpush1.msra.mxu0 0.0
    %362 = vmatprep.subr.mxu0 0.0
    %363 = vmatpush1.msra.mxu0 0.0
    %364 = vmatprep.subr.mxu0 0.0
    %365 = vmatpush1.msra.mxu0 0.0
    %366 = vmatprep.subr.mxu0 0.0
    %367 = vmatpush1.msra.mxu0 0.0
    %368 = vmatprep.subr.mxu0 0.0
    %369 = vmatpush1.msra.mxu0 0.0
    %370 = vmatprep.subr.mxu0 0.0
    %371 = vmatpush1.msra.mxu0 0.0
    %372 = vmatprep.subr.mxu0 0.0
    %373 = vmatpush1.msra.mxu0 0.0
    %374 = vmatprep.subr.mxu0 0.0
    %375 = vmatpush1.msra.mxu0 0.0
    %376 = vmatprep.subr.mxu0 0.0
    %377 = vmatpush1.msra.mxu0 0.0
    %378 = vmatprep.subr.mxu0 0.0
    %379 = vmatpush1.msra.mxu0 0.0
    %380 = vmatprep.subr.mxu0 0.0
    %381 = vmatpush1.msra.mxu0 0.0
    %382 = vmatprep.subr.mxu0 0.0
    %383 = vmatpush1.msra.mxu0 0.0
    %384 = vmatprep.subr.mxu0 0.0
    %385 = vmatpush1.msra.mxu0 0.0
    %386 = vmatprep.subr.mxu0 0.0
    %387 = vmatpush1.msra.mxu0 0.0
    %388 = vmatprep.subr.mxu0 0.0
    %389 = vmatpush1.msra.mxu0 0.0
    %390 = vmatprep.subr.mxu0 0.0
    %391 = vmatpush1.msra.mxu0 0.0
    %392 = vmatprep.subr.mxu0 0.0
    %393 = vmatpush1.msra.mxu0 0.0
    %394 = vmatprep.subr.mxu0 0.0
    %395 = vmatpush1.msra.mxu0 0.0
    %396 = vmatprep.subr.mxu0 0.0
    %397 = vmatpush1.msra.mxu0 0.0
    %398 = vmatprep.subr.mxu0 0.0
    %399 = vmatpush1.msra.mxu0 0.0
    %400 = vmatprep.subr.mxu0 0.0
    %401 = vmatpush1.msra.mxu0 0.0
    %402 = vmatprep.subr.mxu0 0.0
    %403 = vmatpush1.msra.mxu0 0.0
    %404 = vmatprep.mubr.f32.mxu0 0.0
    %405 = vmatmul.mubr.f32.gmra.mrb[0].mxu0 %v338
    %v406 = vpop.f32.mrb[0].mxu0
    %v407 = vadd.f32 0.0, %v406
    %v408 = vpop.f32.mrb[0].mxu0
    %409 = vdwg.mxu0
    %410 = vrot.lane.b32.xlu0 %v125, 64
    %v411 = vpop.permute.xlu0 %410
    %v414 = vsel %vm136, %v333, 0
    %416 = vmatprep.subr.mxu0 0.0
    %417 = vmatpush1.msra.mxu0 %v411
    %418 = vmatprep.subr.mxu0 0.0
    %419 = vmatpush1.msra.mxu0 0.0
    %420 = vmatprep.subr.mxu0 0.0
    %421 = vmatpush1.msra.mxu0 0.0
    %422 = vmatprep.subr.mxu0 0.0
    %423 = vmatpush1.msra.mxu0 0.0
    %424 = vmatprep.subr.mxu0 0.0
    %425 = vmatpush1.msra.mxu0 0.0
    %426 = vmatprep.subr.mxu0 0.0
    %427 = vmatpush1.msra.mxu0 0.0
    %428 = vmatprep.subr.mxu0 0.0
    %429 = vmatpush1.msra.mxu0 0.0
    %430 = vmatprep.subr.mxu0 0.0
    %431 = vmatpush1.msra.mxu0 0.0
    %432 = vmatprep.subr.mxu0 0.0
    %433 = vmatpush1.msra.mxu0 0.0
    %434 = vmatprep.subr.mxu0 0.0
    %435 = vmatpush1.msra.mxu0 0.0
    %436 = vmatprep.subr.mxu0 0.0
    %437 = vmatpush1.msra.mxu0 0.0
    %438 = vmatprep.subr.mxu0 0.0
    %439 = vmatpush1.msra.mxu0 0.0
    %440 = vmatprep.subr.mxu0 0.0
    %441 = vmatpush1.msra.mxu0 0.0
    %442 = vmatprep.subr.mxu0 0.0
    %443 = vmatpush1.msra.mxu0 0.0
    %444 = vmatprep.subr.mxu0 0.0
    %445 = vmatpush1.msra.mxu0 0.0
    %446 = vmatprep.subr.mxu0 0.0
    %447 = vmatpush1.msra.mxu0 0.0
    %448 = vmatprep.subr.mxu0 0.0
    %449 = vmatpush1.msra.mxu0 0.0
    %450 = vmatprep.subr.mxu0 0.0
    %451 = vmatpush1.msra.mxu0 0.0
    %452 = vmatprep.subr.mxu0 0.0
    %453 = vmatpush1.msra.mxu0 0.0
    %454 = vmatprep.subr.mxu0 0.0
    %455 = vmatpush1.msra.mxu0 0.0
    %456 = vmatprep.subr.mxu0 0.0
    %457 = vmatpush1.msra.mxu0 0.0
    %458 = vmatprep.subr.mxu0 0.0
    %459 = vmatpush1.msra.mxu0 0.0
    %460 = vmatprep.subr.mxu0 0.0
    %461 = vmatpush1.msra.mxu0 0.0
    %462 = vmatprep.subr.mxu0 0.0
    %463 = vmatpush1.msra.mxu0 0.0
    %464 = vmatprep.subr.mxu0 0.0
    %465 = vmatpush1.msra.mxu0 0.0
    %466 = vmatprep.subr.mxu0 0.0
    %467 = vmatpush1.msra.mxu0 0.0
    %468 = vmatprep.subr.mxu0 0.0
    %469 = vmatpush1.msra.mxu0 0.0
    %470 = vmatprep.subr.mxu0 0.0
    %471 = vmatpush1.msra.mxu0 0.0
    %472 = vmatprep.subr.mxu0 0.0
    %473 = vmatpush1.msra.mxu0 0.0
    %474 = vmatprep.subr.mxu0 0.0
    %475 = vmatpush1.msra.mxu0 0.0
    %476 = vmatprep.subr.mxu0 0.0
    %477 = vmatpush1.msra.mxu0 0.0
    %478 = vmatprep.subr.mxu0 0.0
    %479 = vmatpush1.msra.mxu0 0.0
    %480 = vmatprep.mubr.f32.mxu0 0.0
    %481 = vmatmul.mubr.f32.gmra.mrb[0].mxu0 %v414
    %v482 = vpop.f32.mrb[0].mxu0
    %v483 = vadd.f32 0.0, %v482
    %v484 = vpop.f32.mrb[0].mxu0
    %485 = vdwg.mxu0
    %486 = vrot.lane.b32.xlu0 %v120, 120
    %v487 = vpop.permute.xlu0 %486
    %488 = vrot.lane.b32.xlu0 %v120, 88
    %v489 = vpop.permute.xlu0 %488
    %v490 = vsel %vm136, %v487, 0
    %v492 = vsel %vm136, %v489, 0
    %494 = vmatprep.subr.mxu0 0.0
    %495 = vmatpush1.xpose.msra.mxu0 %v492
    %496 = vmatprep.subr.mxu0 0.0
    %497 = vmatpush1.xpose.msra.mxu0 0.0
    %498 = vmatprep.subr.mxu0 0.0
    %499 = vmatpush1.xpose.msra.mxu0 0.0
    %500 = vmatprep.subr.mxu0 0.0
    %501 = vmatpush1.xpose.msra.mxu0 0.0
    %502 = vmatprep.subr.mxu0 0.0
    %503 = vmatpush1.xpose.msra.mxu0 0.0
    %504 = vmatprep.subr.mxu0 0.0
    %505 = vmatpush1.xpose.msra.mxu0 0.0
    %506 = vmatprep.subr.mxu0 0.0
    %507 = vmatpush1.xpose.msra.mxu0 0.0
    %508 = vmatprep.subr.mxu0 0.0
    %509 = vmatpush1.xpose.msra.mxu0 0.0
    %510 = vmatprep.subr.mxu0 0.0
    %511 = vmatpush1.xpose.msra.mxu0 0.0
    %512 = vmatprep.subr.mxu0 0.0
    %513 = vmatpush1.xpose.msra.mxu0 0.0
    %514 = vmatprep.subr.mxu0 0.0
    %515 = vmatpush1.xpose.msra.mxu0 0.0
    %516 = vmatprep.subr.mxu0 0.0
    %517 = vmatpush1.xpose.msra.mxu0 0.0
    %518 = vmatprep.subr.mxu0 0.0
    %519 = vmatpush1.xpose.msra.mxu0 0.0
    %520 = vmatprep.subr.mxu0 0.0
    %521 = vmatpush1.xpose.msra.mxu0 0.0
    %522 = vmatprep.subr.mxu0 0.0
    %523 = vmatpush1.xpose.msra.mxu0 0.0
    %524 = vmatprep.subr.mxu0 0.0
    %525 = vmatpush1.xpose.msra.mxu0 0.0
    %526 = vmatprep.subr.mxu0 0.0
    %527 = vmatpush1.xpose.msra.mxu0 0.0
    %528 = vmatprep.subr.mxu0 0.0
    %529 = vmatpush1.xpose.msra.mxu0 0.0
    %530 = vmatprep.subr.mxu0 0.0
    %531 = vmatpush1.xpose.msra.mxu0 0.0
    %532 = vmatprep.subr.mxu0 0.0
    %533 = vmatpush1.xpose.msra.mxu0 0.0
    %534 = vmatprep.subr.mxu0 0.0
    %535 = vmatpush1.xpose.msra.mxu0 0.0
    %536 = vmatprep.subr.mxu0 0.0
    %537 = vmatpush1.xpose.msra.mxu0 0.0
    %538 = vmatprep.subr.mxu0 0.0
    %539 = vmatpush1.xpose.msra.mxu0 0.0
    %540 = vmatprep.subr.mxu0 0.0
    %541 = vmatpush1.xpose.msra.mxu0 0.0
    %542 = vmatprep.subr.mxu0 0.0
    %543 = vmatpush1.xpose.msra.mxu0 0.0
    %544 = vmatprep.subr.mxu0 0.0
    %545 = vmatpush1.xpose.msra.mxu0 0.0
    %546 = vmatprep.subr.mxu0 0.0
    %547 = vmatpush1.xpose.msra.mxu0 0.0
    %548 = vmatprep.subr.mxu0 0.0
    %549 = vmatpush1.xpose.msra.mxu0 0.0
    %550 = vmatprep.subr.mxu0 0.0
    %551 = vmatpush1.xpose.msra.mxu0 0.0
    %552 = vmatprep.subr.mxu0 0.0
    %553 = vmatpush1.xpose.msra.mxu0 0.0
    %554 = vmatprep.subr.mxu0 0.0
    %555 = vmatpush1.xpose.msra.mxu0 0.0
    %556 = vmatprep.subr.mxu0 0.0
    %557 = vmatpush1.xpose.msra.mxu0 0.0
    %558 = vmatprep.mubr.f32.mxu0 0.0
    %559 = vmatmul.mubr.f32.gmra.mrb[0].mxu0 %v490
    %v560 = vpop.f32.mrb[0].mxu0
    %v561 = vadd.f32 0.0, %v560
    %v562 = vpop.f32.mrb[0].mxu0
    %563 = vdwg.mxu0
    %564 = vrot.lane.b32.xlu0 %v125, 120
    %v565 = vpop.permute.xlu0 %564
    %566 = vrot.lane.b32.xlu0 %v125, 88
    %v567 = vpop.permute.xlu0 %566
    %v568 = vsel %vm136, %v565, 0
    %v570 = vsel %vm136, %v567, 0
    %572 = vmatprep.subr.mxu0 0.0
    %573 = vmatpush1.xpose.msra.mxu0 %v570
    %574 = vmatprep.subr.mxu0 0.0
    %575 = vmatpush1.xpose.msra.mxu0 0.0
    %576 = vmatprep.subr.mxu0 0.0
    %577 = vmatpush1.xpose.msra.mxu0 0.0
    %578 = vmatprep.subr.mxu0 0.0
    %579 = vmatpush1.xpose.msra.mxu0 0.0
    %580 = vmatprep.subr.mxu0 0.0
    %581 = vmatpush1.xpose.msra.mxu0 0.0
    %582 = vmatprep.subr.mxu0 0.0
    %583 = vmatpush1.xpose.msra.mxu0 0.0
    %584 = vmatprep.subr.mxu0 0.0
    %585 = vmatpush1.xpose.msra.mxu0 0.0
    %586 = vmatprep.subr.mxu0 0.0
    %587 = vmatpush1.xpose.msra.mxu0 0.0
    %588 = vmatprep.subr.mxu0 0.0
    %589 = vmatpush1.xpose.msra.mxu0 0.0
    %590 = vmatprep.subr.mxu0 0.0
    %591 = vmatpush1.xpose.msra.mxu0 0.0
    %592 = vmatprep.subr.mxu0 0.0
    %593 = vmatpush1.xpose.msra.mxu0 0.0
    %594 = vmatprep.subr.mxu0 0.0
    %595 = vmatpush1.xpose.msra.mxu0 0.0
    %596 = vmatprep.subr.mxu0 0.0
    %597 = vmatpush1.xpose.msra.mxu0 0.0
    %598 = vmatprep.subr.mxu0 0.0
    %599 = vmatpush1.xpose.msra.mxu0 0.0
    %600 = vmatprep.subr.mxu0 0.0
    %601 = vmatpush1.xpose.msra.mxu0 0.0
    %602 = vmatprep.subr.mxu0 0.0
    %603 = vmatpush1.xpose.msra.mxu0 0.0
    %604 = vmatprep.subr.mxu0 0.0
    %605 = vmatpush1.xpose.msra.mxu0 0.0
    %606 = vmatprep.subr.mxu0 0.0
    %607 = vmatpush1.xpose.msra.mxu0 0.0
    %608 = vmatprep.subr.mxu0 0.0
    %609 = vmatpush1.xpose.msra.mxu0 0.0
    %610 = vmatprep.subr.mxu0 0.0
    %611 = vmatpush1.xpose.msra.mxu0 0.0
    %612 = vmatprep.subr.mxu0 0.0
    %613 = vmatpush1.xpose.msra.mxu0 0.0
    %614 = vmatprep.subr.mxu0 0.0
    %615 = vmatpush1.xpose.msra.mxu0 0.0
    %616 = vmatprep.subr.mxu0 0.0
    %617 = vmatpush1.xpose.msra.mxu0 0.0
    %618 = vmatprep.subr.mxu0 0.0
    %619 = vmatpush1.xpose.msra.mxu0 0.0
    %620 = vmatprep.subr.mxu0 0.0
    %621 = vmatpush1.xpose.msra.mxu0 0.0
    %622 = vmatprep.subr.mxu0 0.0
    %623 = vmatpush1.xpose.msra.mxu0 0.0
    %624 = vmatprep.subr.mxu0 0.0
    %625 = vmatpush1.xpose.msra.mxu0 0.0
    %626 = vmatprep.subr.mxu0 0.0
    %627 = vmatpush1.xpose.msra.mxu0 0.0
    %628 = vmatprep.subr.mxu0 0.0
    %629 = vmatpush1.xpose.msra.mxu0 0.0
    %630 = vmatprep.subr.mxu0 0.0
    %631 = vmatpush1.xpose.msra.mxu0 0.0
    %632 = vmatprep.subr.mxu0 0.0
    %633 = vmatpush1.xpose.msra.mxu0 0.0
    %634 = vmatprep.subr.mxu0 0.0
    %635 = vmatpush1.xpose.msra.mxu0 0.0
    %636 = vmatprep.mubr.f32.mxu0 0.0
    %637 = vmatmul.mubr.f32.gmra.mrb[0].mxu0 %v568
    %v638 = vpop.f32.mrb[0].mxu0
    %v639 = vadd.f32 0.0, %v638
    %v640 = vpop.f32.mrb[0].mxu0
    %641 = vdwg.mxu0
    %v642 = vmul.f32 %v561, 0.17677669
    %v643 = vmul.f32 %v639, 0.17677669
    %v644 = vsel %vm291, %v642, -1e+30
    %v645 = vsel %vm291, %v643, -1e+30
    %v646 = vsel %vm136, %v644, -inf
    %v647 = vrot.slane %v646, 4
    %v648 = vmax.f32 %v646, %v647
    %v649 = vrot.slane %v648, 2
    %v650 = vmax.f32 %v648, %v649
    %v651 = vrot.slane %v650, 1
    %v652 = vmax.f32 %v650, %v651
    %v653 = vsel %vm136, %v645, -inf
    %v654 = vrot.slane %v653, 4
    %v655 = vmax.f32 %v653, %v654
    %v656 = vrot.slane %v655, 2
    %v657 = vmax.f32 %v655, %v656
    %v658 = vrot.slane %v657, 1
    %v659 = vmax.f32 %v657, %v658
    %v660 = vsub.f32 %v644, %v652
    %v661 = vsub.f32 %v645, %v659
    %v662 = vmul.f32 %v660, 1.442695
    %v663 = vpow.pop %v662
    %v664 = vmul.f32 %v661, 1.442695
    %v665 = vpow.pop %v664
    %v666 = vsel %vm291, %v663, 0.0
    %v667 = vsel %vm291, %v665, 0.0
    %v668 = vsel %vm136, %v666, 0.0
    %v669 = vrot.slane %v668, 4
    %v670 = vadd.f32 %v668, %v669
    %v671 = vrot.slane %v670, 2
    %v672 = vadd.f32 %v670, %v671
    %v673 = vrot.slane %v672, 1
    %v674 = vadd.f32 %v672, %v673
    %v675 = vsel %vm136, %v667, 0.0
    %v676 = vrot.slane %v675, 4
    %v677 = vadd.f32 %v675, %v676
    %v678 = vrot.slane %v677, 2
    %v679 = vadd.f32 %v677, %v678
    %v680 = vrot.slane %v679, 1
    %v681 = vadd.f32 %v679, %v680
    %v682 = vrcp.pop %v674
    %v683 = vrcp.pop %v681
    %v684 = vmul.f32 %v666, %v682
    %v685 = vmul.f32 %v667, %v683
    %686 = vrot.lane.b32.xlu0 %v120, 56
    %v687 = vpop.permute.xlu0 %686
    %v690 = vsel %vm136, %v684, 0
    %692 = vmatprep.subr.mxu0 0.0
    %693 = vmatpush1.msra.mxu0 %v687
    %694 = vmatprep.subr.mxu0 0.0
    %695 = vmatpush1.msra.mxu0 0.0
    %696 = vmatprep.subr.mxu0 0.0
    %697 = vmatpush1.msra.mxu0 0.0
    %698 = vmatprep.subr.mxu0 0.0
    %699 = vmatpush1.msra.mxu0 0.0
    %700 = vmatprep.subr.mxu0 0.0
    %701 = vmatpush1.msra.mxu0 0.0
    %702 = vmatprep.subr.mxu0 0.0
    %703 = vmatpush1.msra.mxu0 0.0
    %704 = vmatprep.subr.mxu0 0.0
    %705 = vmatpush1.msra.mxu0 0.0
    %706 = vmatprep.subr.mxu0 0.0
    %707 = vmatpush1.msra.mxu0 0.0
    %708 = vmatprep.subr.mxu0 0.0
    %709 = vmatpush1.msra.mxu0 0.0
    %710 = vmatprep.subr.mxu0 0.0
    %711 = vmatpush1.msra.mxu0 0.0
    %712 = vmatprep.subr.mxu0 0.0
    %713 = vmatpush1.msra.mxu0 0.0
    %714 = vmatprep.subr.mxu0 0.0
    %715 = vmatpush1.msra.mxu0 0.0
    %716 = vmatprep.subr.mxu0 0.0
    %717 = vmatpush1.msra.mxu0 0.0
    %718 = vmatprep.subr.mxu0 0.0
    %719 = vmatpush1.msra.mxu0 0.0
    %720 = vmatprep.subr.mxu0 0.0
    %721 = vmatpush1.msra.mxu0 0.0
    %722 = vmatprep.subr.mxu0 0.0
    %723 = vmatpush1.msra.mxu0 0.0
    %724 = vmatprep.subr.mxu0 0.0
    %725 = vmatpush1.msra.mxu0 0.0
    %726 = vmatprep.subr.mxu0 0.0
    %727 = vmatpush1.msra.mxu0 0.0
    %728 = vmatprep.subr.mxu0 0.0
    %729 = vmatpush1.msra.mxu0 0.0
    %730 = vmatprep.subr.mxu0 0.0
    %731 = vmatpush1.msra.mxu0 0.0
    %732 = vmatprep.subr.mxu0 0.0
    %733 = vmatpush1.msra.mxu0 0.0
    %734 = vmatprep.subr.mxu0 0.0
    %735 = vmatpush1.msra.mxu0 0.0
    %736 = vmatprep.subr.mxu0 0.0
    %737 = vmatpush1.msra.mxu0 0.0
    %738 = vmatprep.subr.mxu0 0.0
    %739 = vmatpush1.msra.mxu0 0.0
    %740 = vmatprep.subr.mxu0 0.0
    %741 = vmatpush1.msra.mxu0 0.0
    %742 = vmatprep.subr.mxu0 0.0
    %743 = vmatpush1.msra.mxu0 0.0
    %744 = vmatprep.subr.mxu0 0.0
    %745 = vmatpush1.msra.mxu0 0.0
    %746 = vmatprep.subr.mxu0 0.0
    %747 = vmatpush1.msra.mxu0 0.0
    %748 = vmatprep.subr.mxu0 0.0
    %749 = vmatpush1.msra.mxu0 0.0
    %750 = vmatprep.subr.mxu0 0.0
    %751 = vmatpush1.msra.mxu0 0.0
    %752 = vmatprep.subr.mxu0 0.0
    %753 = vmatpush1.msra.mxu0 0.0
    %754 = vmatprep.subr.mxu0 0.0
    %755 = vmatpush1.msra.mxu0 0.0
    %756 = vmatprep.mubr.f32.mxu0 0.0
    %757 = vmatmul.mubr.f32.gmra.mrb[0].mxu0 %v690
    %v758 = vpop.f32.mrb[0].mxu0
    %v759 = vadd.f32 0.0, %v758
    %v760 = vpop.f32.mrb[0].mxu0
    %761 = vdwg.mxu0
    %762 = vrot.lane.b32.xlu0 %v125, 56
    %v763 = vpop.permute.xlu0 %762
    %v766 = vsel %vm136, %v685, 0
    %768 = vmatprep.subr.mxu0 0.0
    %769 = vmatpush1.msra.mxu0 %v763
    %770 = vmatprep.subr.mxu0 0.0
    %771 = vmatpush1.msra.mxu0 0.0
    %772 = vmatprep.subr.mxu0 0.0
    %773 = vmatpush1.msra.mxu0 0.0
    %774 = vmatprep.subr.mxu0 0.0
    %775 = vmatpush1.msra.mxu0 0.0
    %776 = vmatprep.subr.mxu0 0.0
    %777 = vmatpush1.msra.mxu0 0.0
    %778 = vmatprep.subr.mxu0 0.0
    %779 = vmatpush1.msra.mxu0 0.0
    %780 = vmatprep.subr.mxu0 0.0
    %781 = vmatpush1.msra.mxu0 0.0
    %782 = vmatprep.subr.mxu0 0.0
    %783 = vmatpush1.msra.mxu0 0.0
    %784 = vmatprep.subr.mxu0 0.0
    %785 = vmatpush1.msra.mxu0 0.0
    %786 = vmatprep.subr.mxu0 0.0
    %787 = vmatpush1.msra.mxu0 0.0
    %788 = vmatprep.subr.mxu0 0.0
    %789 = vmatpush1.msra.mxu0 0.0
    %790 = vmatprep.subr.mxu0 0.0
    %791 = vmatpush1.msra.mxu0 0.0
    %792 = vmatprep.subr.mxu0 0.0
    %793 = vmatpush1.msra.mxu0 0.0
    %794 = vmatprep.subr.mxu0 0.0
    %795 = vmatpush1.msra.mxu0 0.0
    %796 = vmatprep.subr.mxu0 0.0
    %797 = vmatpush1.msra.mxu0 0.0
    %798 = vmatprep.subr.mxu0 0.0
    %799 = vmatpush1.msra.mxu0 0.0
    %800 = vmatprep.subr.mxu0 0.0
    %801 = vmatpush1.msra.mxu0 0.0
    %802 = vmatprep.subr.mxu0 0.0
    %803 = vmatpush1.msra.mxu0 0.0
    %804 = vmatprep.subr.mxu0 0.0
    %805 = vmatpush1.msra.mxu0 0.0
    %806 = vmatprep.subr.mxu0 0.0
    %807 = vmatpush1.msra.mxu0 0.0
    %808 = vmatprep.subr.mxu0 0.0
    %809 = vmatpush1.msra.mxu0 0.0
    %810 = vmatprep.subr.mxu0 0.0
    %811 = vmatpush1.msra.mxu0 0.0
    %812 = vmatprep.subr.mxu0 0.0
    %813 = vmatpush1.msra.mxu0 0.0
    %814 = vmatprep.subr.mxu0 0.0
    %815 = vmatpush1.msra.mxu0 0.0
    %816 = vmatprep.subr.mxu0 0.0
    %817 = vmatpush1.msra.mxu0 0.0
    %818 = vmatprep.subr.mxu0 0.0
    %819 = vmatpush1.msra.mxu0 0.0
    %820 = vmatprep.subr.mxu0 0.0
    %821 = vmatpush1.msra.mxu0 0.0
    %822 = vmatprep.subr.mxu0 0.0
    %823 = vmatpush1.msra.mxu0 0.0
    %824 = vmatprep.subr.mxu0 0.0
    %825 = vmatpush1.msra.mxu0 0.0
    %826 = vmatprep.subr.mxu0 0.0
    %827 = vmatpush1.msra.mxu0 0.0
    %828 = vmatprep.subr.mxu0 0.0
    %829 = vmatpush1.msra.mxu0 0.0
    %830 = vmatprep.subr.mxu0 0.0
    %831 = vmatpush1.msra.mxu0 0.0
    %832 = vmatprep.mubr.f32.mxu0 0.0
    %833 = vmatmul.mubr.f32.gmra.mrb[0].mxu0 %v766
    %v834 = vpop.f32.mrb[0].mxu0
    %v835 = vadd.f32 0.0, %v834
    %v836 = vpop.f32.mrb[0].mxu0
    %837 = vdwg.mxu0
    %838 = vrot.lane.b32.xlu0 %v120, 112
    %v839 = vpop.permute.xlu0 %838
    %840 = vrot.lane.b32.xlu0 %v120, 80
    %v841 = vpop.permute.xlu0 %840
    %v842 = vsel %vm136, %v839, 0
    %v844 = vsel %vm136, %v841, 0
    %846 = vmatprep.subr.mxu0 0.0
    %847 = vmatpush1.xpose.msra.mxu0 %v844
    %848 = vmatprep.subr.mxu0 0.0
    %849 = vmatpush1.xpose.msra.mxu0 0.0
    %850 = vmatprep.subr.mxu0 0.0
    %851 = vmatpush1.xpose.msra.mxu0 0.0
    %852 = vmatprep.subr.mxu0 0.0
    %853 = vmatpush1.xpose.msra.mxu0 0.0
    %854 = vmatprep.subr.mxu0 0.0
    %855 = vmatpush1.xpose.msra.mxu0 0.0
    %856 = vmatprep.subr.mxu0 0.0
    %857 = vmatpush1.xpose.msra.mxu0 0.0
    %858 = vmatprep.subr.mxu0 0.0
    %859 = vmatpush1.xpose.msra.mxu0 0.0
    %860 = vmatprep.subr.mxu0 0.0
    %861 = vmatpush1.xpose.msra.mxu0 0.0
    %862 = vmatprep.subr.mxu0 0.0
    %863 = vmatpush1.xpose.msra.mxu0 0.0
    %864 = vmatprep.subr.mxu0 0.0
    %865 = vmatpush1.xpose.msra.mxu0 0.0
    %866 = vmatprep.subr.mxu0 0.0
    %867 = vmatpush1.xpose.msra.mxu0 0.0
    %868 = vmatprep.subr.mxu0 0.0
    %869 = vmatpush1.xpose.msra.mxu0 0.0
    %870 = vmatprep.subr.mxu0 0.0
    %871 = vmatpush1.xpose.msra.mxu0 0.0
    %872 = vmatprep.subr.mxu0 0.0
    %873 = vmatpush1.xpose.msra.mxu0 0.0
    %874 = vmatprep.subr.mxu0 0.0
    %875 = vmatpush1.xpose.msra.mxu0 0.0
    %876 = vmatprep.subr.mxu0 0.0
    %877 = vmatpush1.xpose.msra.mxu0 0.0
    %878 = vmatprep.subr.mxu0 0.0
    %879 = vmatpush1.xpose.msra.mxu0 0.0
    %880 = vmatprep.subr.mxu0 0.0
    %881 = vmatpush1.xpose.msra.mxu0 0.0
    %882 = vmatprep.subr.mxu0 0.0
    %883 = vmatpush1.xpose.msra.mxu0 0.0
    %884 = vmatprep.subr.mxu0 0.0
    %885 = vmatpush1.xpose.msra.mxu0 0.0
    %886 = vmatprep.subr.mxu0 0.0
    %887 = vmatpush1.xpose.msra.mxu0 0.0
    %888 = vmatprep.subr.mxu0 0.0
    %889 = vmatpush1.xpose.msra.mxu0 0.0
    %890 = vmatprep.subr.mxu0 0.0
    %891 = vmatpush1.xpose.msra.mxu0 0.0
    %892 = vmatprep.subr.mxu0 0.0
    %893 = vmatpush1.xpose.msra.mxu0 0.0
    %894 = vmatprep.subr.mxu0 0.0
    %895 = vmatpush1.xpose.msra.mxu0 0.0
    %896 = vmatprep.subr.mxu0 0.0
    %897 = vmatpush1.xpose.msra.mxu0 0.0
    %898 = vmatprep.subr.mxu0 0.0
    %899 = vmatpush1.xpose.msra.mxu0 0.0
    %900 = vmatprep.subr.mxu0 0.0
    %901 = vmatpush1.xpose.msra.mxu0 0.0
    %902 = vmatprep.subr.mxu0 0.0
    %903 = vmatpush1.xpose.msra.mxu0 0.0
    %904 = vmatprep.subr.mxu0 0.0
    %905 = vmatpush1.xpose.msra.mxu0 0.0
    %906 = vmatprep.subr.mxu0 0.0
    %907 = vmatpush1.xpose.msra.mxu0 0.0
    %908 = vmatprep.subr.mxu0 0.0
    %909 = vmatpush1.xpose.msra.mxu0 0.0
    %910 = vmatprep.mubr.f32.mxu0 0.0
    %911 = vmatmul.mubr.f32.gmra.mrb[0].mxu0 %v842
    %v912 = vpop.f32.mrb[0].mxu0
    %v913 = vadd.f32 0.0, %v912
    %v914 = vpop.f32.mrb[0].mxu0
    %915 = vdwg.mxu0
    %916 = vrot.lane.b32.xlu0 %v125, 112
    %v917 = vpop.permute.xlu0 %916
    %918 = vrot.lane.b32.xlu0 %v125, 80
    %v919 = vpop.permute.xlu0 %918
    %v920 = vsel %vm136, %v917, 0
    %v922 = vsel %vm136, %v919, 0
    %924 = vmatprep.subr.mxu0 0.0
    %925 = vmatpush1.xpose.msra.mxu0 %v922
    %926 = vmatprep.subr.mxu0 0.0
    %927 = vmatpush1.xpose.msra.mxu0 0.0
    %928 = vmatprep.subr.mxu0 0.0
    %929 = vmatpush1.xpose.msra.mxu0 0.0
    %930 = vmatprep.subr.mxu0 0.0
    %931 = vmatpush1.xpose.msra.mxu0 0.0
    %932 = vmatprep.subr.mxu0 0.0
    %933 = vmatpush1.xpose.msra.mxu0 0.0
    %934 = vmatprep.subr.mxu0 0.0
    %935 = vmatpush1.xpose.msra.mxu0 0.0
    %936 = vmatprep.subr.mxu0 0.0
    %937 = vmatpush1.xpose.msra.mxu0 0.0
    %938 = vmatprep.subr.mxu0 0.0
    %939 = vmatpush1.xpose.msra.mxu0 0.0
    %940 = vmatprep.subr.mxu0 0.0
    %941 = vmatpush1.xpose.msra.mxu0 0.0
    %942 = vmatprep.subr.mxu0 0.0
    %943 = vmatpush1.xpose.msra.mxu0 0.0
    %944 = vmatprep.subr.mxu0 0.0
    %945 = vmatpush1.xpose.msra.mxu0 0.0
    %946 = vmatprep.subr.mxu0 0.0
    %947 = vmatpush1.xpose.msra.mxu0 0.0
    %948 = vmatprep.subr.mxu0 0.0
    %949 = vmatpush1.xpose.msra.mxu0 0.0
    %950 = vmatprep.subr.mxu0 0.0
    %951 = vmatpush1.xpose.msra.mxu0 0.0
    %952 = vmatprep.subr.mxu0 0.0
    %953 = vmatpush1.xpose.msra.mxu0 0.0
    %954 = vmatprep.subr.mxu0 0.0
    %955 = vmatpush1.xpose.msra.mxu0 0.0
    %956 = vmatprep.subr.mxu0 0.0
    %957 = vmatpush1.xpose.msra.mxu0 0.0
    %958 = vmatprep.subr.mxu0 0.0
    %959 = vmatpush1.xpose.msra.mxu0 0.0
    %960 = vmatprep.subr.mxu0 0.0
    %961 = vmatpush1.xpose.msra.mxu0 0.0
    %962 = vmatprep.subr.mxu0 0.0
    %963 = vmatpush1.xpose.msra.mxu0 0.0
    %964 = vmatprep.subr.mxu0 0.0
    %965 = vmatpush1.xpose.msra.mxu0 0.0
    %966 = vmatprep.subr.mxu0 0.0
    %967 = vmatpush1.xpose.msra.mxu0 0.0
    %968 = vmatprep.subr.mxu0 0.0
    %969 = vmatpush1.xpose.msra.mxu0 0.0
    %970 = vmatprep.subr.mxu0 0.0
    %971 = vmatpush1.xpose.msra.mxu0 0.0
    %972 = vmatprep.subr.mxu0 0.0
    %973 = vmatpush1.xpose.msra.mxu0 0.0
    %974 = vmatprep.subr.mxu0 0.0
    %975 = vmatpush1.xpose.msra.mxu0 0.0
    %976 = vmatprep.subr.mxu0 0.0
    %977 = vmatpush1.xpose.msra.mxu0 0.0
    %978 = vmatprep.subr.mxu0 0.0
    %979 = vmatpush1.xpose.msra.mxu0 0.0
    %980 = vmatprep.subr.mxu0 0.0
    %981 = vmatpush1.xpose.msra.mxu0 0.0
    %982 = vmatprep.subr.mxu0 0.0
    %983 = vmatpush1.xpose.msra.mxu0 0.0
    %984 = vmatprep.subr.mxu0 0.0
    %985 = vmatpush1.xpose.msra.mxu0 0.0
    %986 = vmatprep.subr.mxu0 0.0
    %987 = vmatpush1.xpose.msra.mxu0 0.0
    %988 = vmatprep.mubr.f32.mxu0 0.0
    %989 = vmatmul.mubr.f32.gmra.mrb[0].mxu0 %v920
    %v990 = vpop.f32.mrb[0].mxu0
    %v991 = vadd.f32 0.0, %v990
    %v992 = vpop.f32.mrb[0].mxu0
    %993 = vdwg.mxu0
    %v994 = vmul.f32 %v913, 0.17677669
    %v995 = vmul.f32 %v991, 0.17677669
    %v996 = vsel %vm291, %v994, -1e+30
    %v997 = vsel %vm291, %v995, -1e+30
    %v998 = vsel %vm136, %v996, -inf
    %v999 = vrot.slane %v998, 4
    %v1000 = vmax.f32 %v998, %v999
    %v1001 = vrot.slane %v1000, 2
    %v1002 = vmax.f32 %v1000, %v1001
    %v1003 = vrot.slane %v1002, 1
    %v1004 = vmax.f32 %v1002, %v1003
    %v1005 = vsel %vm136, %v997, -inf
    %v1006 = vrot.slane %v1005, 4
    %v1007 = vmax.f32 %v1005, %v1006
    %v1008 = vrot.slane %v1007, 2
    %v1009 = vmax.f32 %v1007, %v1008
    %v1010 = vrot.slane %v1009, 1
    %v1011 = vmax.f32 %v1009, %v1010
    %v1012 = vsub.f32 %v996, %v1004
    %v1013 = vsub.f32 %v997, %v1011
    %v1014 = vmul.f32 %v1012, 1.442695
    %v1015 = vpow.pop %v1014
    %v1016 = vmul.f32 %v1013, 1.442695
    %v1017 = vpow.pop %v1016
    %v1018 = vsel %vm291, %v1015, 0.0
    %v1019 = vsel %vm291, %v1017, 0.0
    %v1020 = vsel %vm136, %v1018, 0.0
    %v1021 = vrot.slane %v1020, 4
    %v1022 = vadd.f32 %v1020, %v1021
    %v1023 = vrot.slane %v1022, 2
    %v1024 = vadd.f32 %v1022, %v1023
    %v1025 = vrot.slane %v1024, 1
    %v1026 = vadd.f32 %v1024, %v1025
    %v1027 = vsel %vm136, %v1019, 0.0
    %v1028 = vrot.slane %v1027, 4
    %v1029 = vadd.f32 %v1027, %v1028
    %v1030 = vrot.slane %v1029, 2
    %v1031 = vadd.f32 %v1029, %v1030
    %v1032 = vrot.slane %v1031, 1
    %v1033 = vadd.f32 %v1031, %v1032
    %v1034 = vrcp.pop %v1026
    %v1035 = vrcp.pop %v1033
    %v1036 = vmul.f32 %v1018, %v1034
    %v1037 = vmul.f32 %v1019, %v1035
    %1038 = vrot.lane.b32.xlu0 %v120, 48
    %v1039 = vpop.permute.xlu0 %1038
    %v1042 = vsel %vm136, %v1036, 0
    %1044 = vmatprep.subr.mxu0 0.0
    %1045 = vmatpush1.msra.mxu0 %v1039
    %1046 = vmatprep.subr.mxu0 0.0
    %1047 = vmatpush1.msra.mxu0 0.0
    %1048 = vmatprep.subr.mxu0 0.0
    %1049 = vmatpush1.msra.mxu0 0.0
    %1050 = vmatprep.subr.mxu0 0.0
    %1051 = vmatpush1.msra.mxu0 0.0
    %1052 = vmatprep.subr.mxu0 0.0
    %1053 = vmatpush1.msra.mxu0 0.0
    %1054 = vmatprep.subr.mxu0 0.0
    %1055 = vmatpush1.msra.mxu0 0.0
    %1056 = vmatprep.subr.mxu0 0.0
    %1057 = vmatpush1.msra.mxu0 0.0
    %1058 = vmatprep.subr.mxu0 0.0
    %1059 = vmatpush1.msra.mxu0 0.0
    %1060 = vmatprep.subr.mxu0 0.0
    %1061 = vmatpush1.msra.mxu0 0.0
    %1062 = vmatprep.subr.mxu0 0.0
    %1063 = vmatpush1.msra.mxu0 0.0
    %1064 = vmatprep.subr.mxu0 0.0
    %1065 = vmatpush1.msra.mxu0 0.0
    %1066 = vmatprep.subr.mxu0 0.0
    %1067 = vmatpush1.msra.mxu0 0.0
    %1068 = vmatprep.subr.mxu0 0.0
    %1069 = vmatpush1.msra.mxu0 0.0
    %1070 = vmatprep.subr.mxu0 0.0
    %1071 = vmatpush1.msra.mxu0 0.0
    %1072 = vmatprep.subr.mxu0 0.0
    %1073 = vmatpush1.msra.mxu0 0.0
    %1074 = vmatprep.subr.mxu0 0.0
    %1075 = vmatpush1.msra.mxu0 0.0
    %1076 = vmatprep.subr.mxu0 0.0
    %1077 = vmatpush1.msra.mxu0 0.0
    %1078 = vmatprep.subr.mxu0 0.0
    %1079 = vmatpush1.msra.mxu0 0.0
    %1080 = vmatprep.subr.mxu0 0.0
    %1081 = vmatpush1.msra.mxu0 0.0
    %1082 = vmatprep.subr.mxu0 0.0
    %1083 = vmatpush1.msra.mxu0 0.0
    %1084 = vmatprep.subr.mxu0 0.0
    %1085 = vmatpush1.msra.mxu0 0.0
    %1086 = vmatprep.subr.mxu0 0.0
    %1087 = vmatpush1.msra.mxu0 0.0
    %1088 = vmatprep.subr.mxu0 0.0
    %1089 = vmatpush1.msra.mxu0 0.0
    %1090 = vmatprep.subr.mxu0 0.0
    %1091 = vmatpush1.msra.mxu0 0.0
    %1092 = vmatprep.subr.mxu0 0.0
    %1093 = vmatpush1.msra.mxu0 0.0
    %1094 = vmatprep.subr.mxu0 0.0
    %1095 = vmatpush1.msra.mxu0 0.0
    %1096 = vmatprep.subr.mxu0 0.0
    %1097 = vmatpush1.msra.mxu0 0.0
    %1098 = vmatprep.subr.mxu0 0.0
    %1099 = vmatpush1.msra.mxu0 0.0
    %1100 = vmatprep.subr.mxu0 0.0
    %1101 = vmatpush1.msra.mxu0 0.0
    %1102 = vmatprep.subr.mxu0 0.0
    %1103 = vmatpush1.msra.mxu0 0.0
    %1104 = vmatprep.subr.mxu0 0.0
    %1105 = vmatpush1.msra.mxu0 0.0
    %1106 = vmatprep.subr.mxu0 0.0
    %1107 = vmatpush1.msra.mxu0 0.0
    %1108 = vmatprep.mubr.f32.mxu0 0.0
    %1109 = vmatmul.mubr.f32.gmra.mrb[0].mxu0 %v1042
    %v1110 = vpop.f32.mrb[0].mxu0
    %v1111 = vadd.f32 0.0, %v1110
    %v1112 = vpop.f32.mrb[0].mxu0
    %1113 = vdwg.mxu0
    %1114 = vrot.lane.b32.xlu0 %v125, 48
    %v1115 = vpop.permute.xlu0 %1114
    %v1118 = vsel %vm136, %v1037, 0
    %1120 = vmatprep.subr.mxu0 0.0
    %1121 = vmatpush1.msra.mxu0 %v1115
    %1122 = vmatprep.subr.mxu0 0.0
    %1123 = vmatpush1.msra.mxu0 0.0
    %1124 = vmatprep.subr.mxu0 0.0
    %1125 = vmatpush1.msra.mxu0 0.0
    %1126 = vmatprep.subr.mxu0 0.0
    %1127 = vmatpush1.msra.mxu0 0.0
    %1128 = vmatprep.subr.mxu0 0.0
    %1129 = vmatpush1.msra.mxu0 0.0
    %1130 = vmatprep.subr.mxu0 0.0
    %1131 = vmatpush1.msra.mxu0 0.0
    %1132 = vmatprep.subr.mxu0 0.0
    %1133 = vmatpush1.msra.mxu0 0.0
    %1134 = vmatprep.subr.mxu0 0.0
    %1135 = vmatpush1.msra.mxu0 0.0
    %1136 = vmatprep.subr.mxu0 0.0
    %1137 = vmatpush1.msra.mxu0 0.0
    %1138 = vmatprep.subr.mxu0 0.0
    %1139 = vmatpush1.msra.mxu0 0.0
    %1140 = vmatprep.subr.mxu0 0.0
    %1141 = vmatpush1.msra.mxu0 0.0
    %1142 = vmatprep.subr.mxu0 0.0
    %1143 = vmatpush1.msra.mxu0 0.0
    %1144 = vmatprep.subr.mxu0 0.0
    %1145 = vmatpush1.msra.mxu0 0.0
    %1146 = vmatprep.subr.mxu0 0.0
    %1147 = vmatpush1.msra.mxu0 0.0
    %1148 = vmatprep.subr.mxu0 0.0
    %1149 = vmatpush1.msra.mxu0 0.0
    %1150 = vmatprep.subr.mxu0 0.0
    %1151 = vmatpush1.msra.mxu0 0.0
    %1152 = vmatprep.subr.mxu0 0.0
    %1153 = vmatpush1.msra.mxu0 0.0
    %1154 = vmatprep.subr.mxu0 0.0
    %1155 = vmatpush1.msra.mxu0 0.0
    %1156 = vmatprep.subr.mxu0 0.0
    %1157 = vmatpush1.msra.mxu0 0.0
    %1158 = vmatprep.subr.mxu0 0.0
    %1159 = vmatpush1.msra.mxu0 0.0
    %1160 = vmatprep.subr.mxu0 0.0
    %1161 = vmatpush1.msra.mxu0 0.0
    %1162 = vmatprep.subr.mxu0 0.0
    %1163 = vmatpush1.msra.mxu0 0.0
    %1164 = vmatprep.subr.mxu0 0.0
    %1165 = vmatpush1.msra.mxu0 0.0
    %1166 = vmatprep.subr.mxu0 0.0
    %1167 = vmatpush1.msra.mxu0 0.0
    %1168 = vmatprep.subr.mxu0 0.0
    %1169 = vmatpush1.msra.mxu0 0.0
    %1170 = vmatprep.subr.mxu0 0.0
    %1171 = vmatpush1.msra.mxu0 0.0
    %1172 = vmatprep.subr.mxu0 0.0
    %1173 = vmatpush1.msra.mxu0 0.0
    %1174 = vmatprep.subr.mxu0 0.0
    %1175 = vmatpush1.msra.mxu0 0.0
    %1176 = vmatprep.subr.mxu0 0.0
    %1177 = vmatpush1.msra.mxu0 0.0
    %1178 = vmatprep.subr.mxu0 0.0
    %1179 = vmatpush1.msra.mxu0 0.0
    %1180 = vmatprep.subr.mxu0 0.0
    %1181 = vmatpush1.msra.mxu0 0.0
    %1182 = vmatprep.subr.mxu0 0.0
    %1183 = vmatpush1.msra.mxu0 0.0
    %1184 = vmatprep.mubr.f32.mxu0 0.0
    %1185 = vmatmul.mubr.f32.gmra.mrb[0].mxu0 %v1118
    %v1186 = vpop.f32.mrb[0].mxu0
    %v1187 = vadd.f32 0.0, %v1186
    %v1188 = vpop.f32.mrb[0].mxu0
    %1189 = vdwg.mxu0
    %1190 = vrot.lane.b32.xlu0 %v120, 104
    %v1191 = vpop.permute.xlu0 %1190
    %1192 = vrot.lane.b32.xlu0 %v120, 72
    %v1193 = vpop.permute.xlu0 %1192
    %v1194 = vsel %vm136, %v1191, 0
    %v1196 = vsel %vm136, %v1193, 0
    %1198 = vmatprep.subr.mxu0 0.0
    %1199 = vmatpush1.xpose.msra.mxu0 %v1196
    %1200 = vmatprep.subr.mxu0 0.0
    %1201 = vmatpush1.xpose.msra.mxu0 0.0
    %1202 = vmatprep.subr.mxu0 0.0
    %1203 = vmatpush1.xpose.msra.mxu0 0.0
    %1204 = vmatprep.subr.mxu0 0.0
    %1205 = vmatpush1.xpose.msra.mxu0 0.0
    %1206 = vmatprep.subr.mxu0 0.0
    %1207 = vmatpush1.xpose.msra.mxu0 0.0
    %1208 = vmatprep.subr.mxu0 0.0
    %1209 = vmatpush1.xpose.msra.mxu0 0.0
    %1210 = vmatprep.subr.mxu0 0.0
    %1211 = vmatpush1.xpose.msra.mxu0 0.0
    %1212 = vmatprep.subr.mxu0 0.0
    %1213 = vmatpush1.xpose.msra.mxu0 0.0
    %1214 = vmatprep.subr.mxu0 0.0
    %1215 = vmatpush1.xpose.msra.mxu0 0.0
    %1216 = vmatprep.subr.mxu0 0.0
    %1217 = vmatpush1.xpose.msra.mxu0 0.0
    %1218 = vmatprep.subr.mxu0 0.0
    %1219 = vmatpush1.xpose.msra.mxu0 0.0
    %1220 = vmatprep.subr.mxu0 0.0
    %1221 = vmatpush1.xpose.msra.mxu0 0.0
    %1222 = vmatprep.subr.mxu0 0.0
    %1223 = vmatpush1.xpose.msra.mxu0 0.0
    %1224 = vmatprep.subr.mxu0 0.0
    %1225 = vmatpush1.xpose.msra.mxu0 0.0
    %1226 = vmatprep.subr.mxu0 0.0
    %1227 = vmatpush1.xpose.msra.mxu0 0.0
    %1228 = vmatprep.subr.mxu0 0.0
    %1229 = vmatpush1.xpose.msra.mxu0 0.0
    %1230 = vmatprep.subr.mxu0 0.0
    %1231 = vmatpush1.xpose.msra.mxu0 0.0
    %1232 = vmatprep.subr.mxu0 0.0
    %1233 = vmatpush1.xpose.msra.mxu0 0.0
    %1234 = vmatprep.subr.mxu0 0.0
    %1235 = vmatpush1.xpose.msra.mxu0 0.0
    %1236 = vmatprep.subr.mxu0 0.0
    %1237 = vmatpush1.xpose.msra.mxu0 0.0
    %1238 = vmatprep.subr.mxu0 0.0
    %1239 = vmatpush1.xpose.msra.mxu0 0.0
    %1240 = vmatprep.subr.mxu0 0.0
    %1241 = vmatpush1.xpose.msra.mxu0 0.0
    %1242 = vmatprep.subr.mxu0 0.0
    %1243 = vmatpush1.xpose.msra.mxu0 0.0
    %1244 = vmatprep.subr.mxu0 0.0
    %1245 = vmatpush1.xpose.msra.mxu0 0.0
    %1246 = vmatprep.subr.mxu0 0.0
    %1247 = vmatpush1.xpose.msra.mxu0 0.0
    %1248 = vmatprep.subr.mxu0 0.0
    %1249 = vmatpush1.xpose.msra.mxu0 0.0
    %1250 = vmatprep.subr.mxu0 0.0
    %1251 = vmatpush1.xpose.msra.mxu0 0.0
    %1252 = vmatprep.subr.mxu0 0.0
    %1253 = vmatpush1.xpose.msra.mxu0 0.0
    %1254 = vmatprep.subr.mxu0 0.0
    %1255 = vmatpush1.xpose.msra.mxu0 0.0
    %1256 = vmatprep.subr.mxu0 0.0
    %1257 = vmatpush1.xpose.msra.mxu0 0.0
    %1258 = vmatprep.subr.mxu0 0.0
    %1259 = vmatpush1.xpose.msra.mxu0 0.0
    %1260 = vmatprep.subr.mxu0 0.0
    %1261 = vmatpush1.xpose.msra.mxu0 0.0
    %1262 = vmatprep.mubr.f32.mxu0 0.0
    %1263 = vmatmul.mubr.f32.gmra.mrb[0].mxu0 %v1194
    %v1264 = vpop.f32.mrb[0].mxu0
    %v1265 = vadd.f32 0.0, %v1264
    %v1266 = vpop.f32.mrb[0].mxu0
    %1267 = vdwg.mxu0
    %1268 = vrot.lane.b32.xlu0 %v125, 104
    %v1269 = vpop.permute.xlu0 %1268
    %1270 = vrot.lane.b32.xlu0 %v125, 72
    %v1271 = vpop.permute.xlu0 %1270
    %v1272 = vsel %vm136, %v1269, 0
    %v1274 = vsel %vm136, %v1271, 0
    %1276 = vmatprep.subr.mxu0 0.0
    %1277 = vmatpush1.xpose.msra.mxu0 %v1274
    %1278 = vmatprep.subr.mxu0 0.0
    %1279 = vmatpush1.xpose.msra.mxu0 0.0
    %1280 = vmatprep.subr.mxu0 0.0
    %1281 = vmatpush1.xpose.msra.mxu0 0.0
    %1282 = vmatprep.subr.mxu0 0.0
    %1283 = vmatpush1.xpose.msra.mxu0 0.0
    %1284 = vmatprep.subr.mxu0 0.0
    %1285 = vmatpush1.xpose.msra.mxu0 0.0
    %1286 = vmatprep.subr.mxu0 0.0
    %1287 = vmatpush1.xpose.msra.mxu0 0.0
    %1288 = vmatprep.subr.mxu0 0.0
    %1289 = vmatpush1.xpose.msra.mxu0 0.0
    %1290 = vmatprep.subr.mxu0 0.0
    %1291 = vmatpush1.xpose.msra.mxu0 0.0
    %1292 = vmatprep.subr.mxu0 0.0
    %1293 = vmatpush1.xpose.msra.mxu0 0.0
    %1294 = vmatprep.subr.mxu0 0.0
    %1295 = vmatpush1.xpose.msra.mxu0 0.0
    %1296 = vmatprep.subr.mxu0 0.0
    %1297 = vmatpush1.xpose.msra.mxu0 0.0
    %1298 = vmatprep.subr.mxu0 0.0
    %1299 = vmatpush1.xpose.msra.mxu0 0.0
    %1300 = vmatprep.subr.mxu0 0.0
    %1301 = vmatpush1.xpose.msra.mxu0 0.0
    %1302 = vmatprep.subr.mxu0 0.0
    %1303 = vmatpush1.xpose.msra.mxu0 0.0
    %1304 = vmatprep.subr.mxu0 0.0
    %1305 = vmatpush1.xpose.msra.mxu0 0.0
    %1306 = vmatprep.subr.mxu0 0.0
    %1307 = vmatpush1.xpose.msra.mxu0 0.0
    %1308 = vmatprep.subr.mxu0 0.0
    %1309 = vmatpush1.xpose.msra.mxu0 0.0
    %1310 = vmatprep.subr.mxu0 0.0
    %1311 = vmatpush1.xpose.msra.mxu0 0.0
    %1312 = vmatprep.subr.mxu0 0.0
    %1313 = vmatpush1.xpose.msra.mxu0 0.0
    %1314 = vmatprep.subr.mxu0 0.0
    %1315 = vmatpush1.xpose.msra.mxu0 0.0
    %1316 = vmatprep.subr.mxu0 0.0
    %1317 = vmatpush1.xpose.msra.mxu0 0.0
    %1318 = vmatprep.subr.mxu0 0.0
    %1319 = vmatpush1.xpose.msra.mxu0 0.0
    %1320 = vmatprep.subr.mxu0 0.0
    %1321 = vmatpush1.xpose.msra.mxu0 0.0
    %1322 = vmatprep.subr.mxu0 0.0
    %1323 = vmatpush1.xpose.msra.mxu0 0.0
    %1324 = vmatprep.subr.mxu0 0.0
    %1325 = vmatpush1.xpose.msra.mxu0 0.0
    %1326 = vmatprep.subr.mxu0 0.0
    %1327 = vmatpush1.xpose.msra.mxu0 0.0
    %1328 = vmatprep.subr.mxu0 0.0
    %1329 = vmatpush1.xpose.msra.mxu0 0.0
    %1330 = vmatprep.subr.mxu0 0.0
    %1331 = vmatpush1.xpose.msra.mxu0 0.0
    %1332 = vmatprep.subr.mxu0 0.0
    %1333 = vmatpush1.xpose.msra.mxu0 0.0
    %1334 = vmatprep.subr.mxu0 0.0
    %1335 = vmatpush1.xpose.msra.mxu0 0.0
    %1336 = vmatprep.subr.mxu0 0.0
    %1337 = vmatpush1.xpose.msra.mxu0 0.0
    %1338 = vmatprep.subr.mxu0 0.0
    %1339 = vmatpush1.xpose.msra.mxu0 0.0
    %1340 = vmatprep.mubr.f32.mxu0 0.0
    %1341 = vmatmul.mubr.f32.gmra.mrb[0].mxu0 %v1272
    %v1342 = vpop.f32.mrb[0].mxu0
    %v1343 = vadd.f32 0.0, %v1342
    %v1344 = vpop.f32.mrb[0].mxu0
    %1345 = vdwg.mxu0
    %v1346 = vmul.f32 %v1265, 0.17677669
    %v1347 = vmul.f32 %v1343, 0.17677669
    %v1348 = vsel %vm291, %v1346, -1e+30
    %v1349 = vsel %vm291, %v1347, -1e+30
    %v1350 = vsel %vm136, %v1348, -inf
    %v1351 = vrot.slane %v1350, 4
    %v1352 = vmax.f32 %v1350, %v1351
    %v1353 = vrot.slane %v1352, 2
    %v1354 = vmax.f32 %v1352, %v1353
    %v1355 = vrot.slane %v1354, 1
    %v1356 = vmax.f32 %v1354, %v1355
    %v1357 = vsel %vm136, %v1349, -inf
    %v1358 = vrot.slane %v1357, 4
    %v1359 = vmax.f32 %v1357, %v1358
    %v1360 = vrot.slane %v1359, 2
    %v1361 = vmax.f32 %v1359, %v1360
    %v1362 = vrot.slane %v1361, 1
    %v1363 = vmax.f32 %v1361, %v1362
    %v1364 = vsub.f32 %v1348, %v1356
    %v1365 = vsub.f32 %v1349, %v1363
    %v1366 = vmul.f32 %v1364, 1.442695
    %v1367 = vpow.pop %v1366
    %v1368 = vmul.f32 %v1365, 1.442695
    %v1369 = vpow.pop %v1368
    %v1370 = vsel %vm291, %v1367, 0.0
    %v1371 = vsel %vm291, %v1369, 0.0
    %v1372 = vsel %vm136, %v1370, 0.0
    %v1373 = vrot.slane %v1372, 4
    %v1374 = vadd.f32 %v1372, %v1373
    %v1375 = vrot.slane %v1374, 2
    %v1376 = vadd.f32 %v1374, %v1375
    %v1377 = vrot.slane %v1376, 1
    %v1378 = vadd.f32 %v1376, %v1377
    %v1379 = vsel %vm136, %v1371, 0.0
    %v1380 = vrot.slane %v1379, 4
    %v1381 = vadd.f32 %v1379, %v1380
    %v1382 = vrot.slane %v1381, 2
    %v1383 = vadd.f32 %v1381, %v1382
    %v1384 = vrot.slane %v1383, 1
    %v1385 = vadd.f32 %v1383, %v1384
    %v1386 = vrcp.pop %v1378
    %v1387 = vrcp.pop %v1385
    %v1388 = vmul.f32 %v1370, %v1386
    %v1389 = vmul.f32 %v1371, %v1387
    %1390 = vrot.lane.b32.xlu0 %v120, 40
    %v1391 = vpop.permute.xlu0 %1390
    %v1394 = vsel %vm136, %v1388, 0
    %1396 = vmatprep.subr.mxu0 0.0
    %1397 = vmatpush1.msra.mxu0 %v1391
    %1398 = vmatprep.subr.mxu0 0.0
    %1399 = vmatpush1.msra.mxu0 0.0
    %1400 = vmatprep.subr.mxu0 0.0
    %1401 = vmatpush1.msra.mxu0 0.0
    %1402 = vmatprep.subr.mxu0 0.0
    %1403 = vmatpush1.msra.mxu0 0.0
    %1404 = vmatprep.subr.mxu0 0.0
    %1405 = vmatpush1.msra.mxu0 0.0
    %1406 = vmatprep.subr.mxu0 0.0
    %1407 = vmatpush1.msra.mxu0 0.0
    %1408 = vmatprep.subr.mxu0 0.0
    %1409 = vmatpush1.msra.mxu0 0.0
    %1410 = vmatprep.subr.mxu0 0.0
    %1411 = vmatpush1.msra.mxu0 0.0
    %1412 = vmatprep.subr.mxu0 0.0
    %1413 = vmatpush1.msra.mxu0 0.0
    %1414 = vmatprep.subr.mxu0 0.0
    %1415 = vmatpush1.msra.mxu0 0.0
    %1416 = vmatprep.subr.mxu0 0.0
    %1417 = vmatpush1.msra.mxu0 0.0
    %1418 = vmatprep.subr.mxu0 0.0
    %1419 = vmatpush1.msra.mxu0 0.0
    %1420 = vmatprep.subr.mxu0 0.0
    %1421 = vmatpush1.msra.mxu0 0.0
    %1422 = vmatprep.subr.mxu0 0.0
    %1423 = vmatpush1.msra.mxu0 0.0
    %1424 = vmatprep.subr.mxu0 0.0
    %1425 = vmatpush1.msra.mxu0 0.0
    %1426 = vmatprep.subr.mxu0 0.0
    %1427 = vmatpush1.msra.mxu0 0.0
    %1428 = vmatprep.subr.mxu0 0.0
    %1429 = vmatpush1.msra.mxu0 0.0
    %1430 = vmatprep.subr.mxu0 0.0
    %1431 = vmatpush1.msra.mxu0 0.0
    %1432 = vmatprep.subr.mxu0 0.0
    %1433 = vmatpush1.msra.mxu0 0.0
    %1434 = vmatprep.subr.mxu0 0.0
    %1435 = vmatpush1.msra.mxu0 0.0
    %1436 = vmatprep.subr.mxu0 0.0
    %1437 = vmatpush1.msra.mxu0 0.0
    %1438 = vmatprep.subr.mxu0 0.0
    %1439 = vmatpush1.msra.mxu0 0.0
    %1440 = vmatprep.subr.mxu0 0.0
    %1441 = vmatpush1.msra.mxu0 0.0
    %1442 = vmatprep.subr.mxu0 0.0
    %1443 = vmatpush1.msra.mxu0 0.0
    %1444 = vmatprep.subr.mxu0 0.0
    %1445 = vmatpush1.msra.mxu0 0.0
    %1446 = vmatprep.subr.mxu0 0.0
    %1447 = vmatpush1.msra.mxu0 0.0
    %1448 = vmatprep.subr.mxu0 0.0
    %1449 = vmatpush1.msra.mxu0 0.0
    %1450 = vmatprep.subr.mxu0 0.0
    %1451 = vmatpush1.msra.mxu0 0.0
    %1452 = vmatprep.subr.mxu0 0.0
    %1453 = vmatpush1.msra.mxu0 0.0
    %1454 = vmatprep.subr.mxu0 0.0
    %1455 = vmatpush1.msra.mxu0 0.0
    %1456 = vmatprep.subr.mxu0 0.0
    %1457 = vmatpush1.msra.mxu0 0.0
    %1458 = vmatprep.subr.mxu0 0.0
    %1459 = vmatpush1.msra.mxu0 0.0
    %1460 = vmatprep.mubr.f32.mxu0 0.0
    %1461 = vmatmul.mubr.f32.gmra.mrb[0].mxu0 %v1394
    %v1462 = vpop.f32.mrb[0].mxu0
    %v1463 = vadd.f32 0.0, %v1462
    %v1464 = vpop.f32.mrb[0].mxu0
    %1465 = vdwg.mxu0
    %1466 = vrot.lane.b32.xlu0 %v125, 40
    %v1467 = vpop.permute.xlu0 %1466
    %v1470 = vsel %vm136, %v1389, 0
    %1472 = vmatprep.subr.mxu0 0.0
    %1473 = vmatpush1.msra.mxu0 %v1467
    %1474 = vmatprep.subr.mxu0 0.0
    %1475 = vmatpush1.msra.mxu0 0.0
    %1476 = vmatprep.subr.mxu0 0.0
    %1477 = vmatpush1.msra.mxu0 0.0
    %1478 = vmatprep.subr.mxu0 0.0
    %1479 = vmatpush1.msra.mxu0 0.0
    %1480 = vmatprep.subr.mxu0 0.0
    %1481 = vmatpush1.msra.mxu0 0.0
    %1482 = vmatprep.subr.mxu0 0.0
    %1483 = vmatpush1.msra.mxu0 0.0
    %1484 = vmatprep.subr.mxu0 0.0
    %1485 = vmatpush1.msra.mxu0 0.0
    %1486 = vmatprep.subr.mxu0 0.0
    %1487 = vmatpush1.msra.mxu0 0.0
    %1488 = vmatprep.subr.mxu0 0.0
    %1489 = vmatpush1.msra.mxu0 0.0
    %1490 = vmatprep.subr.mxu0 0.0
    %1491 = vmatpush1.msra.mxu0 0.0
    %1492 = vmatprep.subr.mxu0 0.0
    %1493 = vmatpush1.msra.mxu0 0.0
    %1494 = vmatprep.subr.mxu0 0.0
    %1495 = vmatpush1.msra.mxu0 0.0
    %1496 = vmatprep.subr.mxu0 0.0
    %1497 = vmatpush1.msra.mxu0 0.0
    %1498 = vmatprep.subr.mxu0 0.0
    %1499 = vmatpush1.msra.mxu0 0.0
    %1500 = vmatprep.subr.mxu0 0.0
    %1501 = vmatpush1.msra.mxu0 0.0
    %1502 = vmatprep.subr.mxu0 0.0
    %1503 = vmatpush1.msra.mxu0 0.0
    %1504 = vmatprep.subr.mxu0 0.0
    %1505 = vmatpush1.msra.mxu0 0.0
    %1506 = vmatprep.subr.mxu0 0.0
    %1507 = vmatpush1.msra.mxu0 0.0
    %1508 = vmatprep.subr.mxu0 0.0
    %1509 = vmatpush1.msra.mxu0 0.0
    %1510 = vmatprep.subr.mxu0 0.0
    %1511 = vmatpush1.msra.mxu0 0.0
    %1512 = vmatprep.subr.mxu0 0.0
    %1513 = vmatpush1.msra.mxu0 0.0
    %1514 = vmatprep.subr.mxu0 0.0
    %1515 = vmatpush1.msra.mxu0 0.0
    %1516 = vmatprep.subr.mxu0 0.0
    %1517 = vmatpush1.msra.mxu0 0.0
    %1518 = vmatprep.subr.mxu0 0.0
    %1519 = vmatpush1.msra.mxu0 0.0
    %1520 = vmatprep.subr.mxu0 0.0
    %1521 = vmatpush1.msra.mxu0 0.0
    %1522 = vmatprep.subr.mxu0 0.0
    %1523 = vmatpush1.msra.mxu0 0.0
    %1524 = vmatprep.subr.mxu0 0.0
    %1525 = vmatpush1.msra.mxu0 0.0
    %1526 = vmatprep.subr.mxu0 0.0
    %1527 = vmatpush1.msra.mxu0 0.0
    %1528 = vmatprep.subr.mxu0 0.0
    %1529 = vmatpush1.msra.mxu0 0.0
    %1530 = vmatprep.subr.mxu0 0.0
    %1531 = vmatpush1.msra.mxu0 0.0
    %1532 = vmatprep.subr.mxu0 0.0
    %1533 = vmatpush1.msra.mxu0 0.0
    %1534 = vmatprep.subr.mxu0 0.0
    %1535 = vmatpush1.msra.mxu0 0.0
    %1536 = vmatprep.mubr.f32.mxu0 0.0
    %1537 = vmatmul.mubr.f32.gmra.mrb[0].mxu0 %v1470
    %v1538 = vpop.f32.mrb[0].mxu0
    %v1539 = vadd.f32 0.0, %v1538
    %v1540 = vpop.f32.mrb[0].mxu0
    %1541 = vdwg.mxu0
    %1544 = vrot.lane.b32.xlu0 %v759, 8
    %v1545 = vpop.permute.xlu0 %1544
    %1546 = vrot.lane.b32.xlu0 %v835, 8
    %v1547 = vpop.permute.xlu0 %1546
    %1552 = vrot.lane.b32.xlu0 %v1111, 16
    %v1553 = vpop.permute.xlu0 %1552
    %1554 = vrot.lane.b32.xlu0 %v1187, 16
    %v1555 = vpop.permute.xlu0 %1554
    %1560 = vrot.lane.b32.xlu0 %v1463, 24
    %v1561 = vpop.permute.xlu0 %1560
    %1562 = vrot.lane.b32.xlu0 %v1539, 24
    %v1563 = vpop.permute.xlu0 %1562
    %v1566 = vsel %vm136, %v407, %v1545
    %v1567 = vsel %vm136, %v483, %v1547
    %vm1568 = vcmask 130048
    %v1569 = vsel %vm1568, %v1566, %v1553
    %v1570 = vsel %vm1568, %v1567, %v1555
    %vm1571 = vcmask 195584
    %v1572 = vsel %vm1571, %v1569, %v1561
    %v1573 = vsel %vm1571, %v1570, %v1563
    %1574 = vst.msk [vmem:[#allocation7] sm:$0xff] %vm46, %v1572
    %1575 = vst.msk [vmem:[#allocation7 + $0x8] sm:$0xff] %vm46, %v1573
    // Predicated region
    $region18: #{tpu_custom_call.1} parent=1 // pred_check
      _
    $region19: #{tpu_custom_call.1} parent=1 // pred_check_branch
      %1577 = sbr.rel (0) target = $region21
    $region20: #{tpu_custom_call.1} parent=1 // pred_region
      %s1579 = ssub.s32 256, 256
      %1580 = vsyncadd [#allocation4], %s1579
      %s1581 = sshll.u32 [#allocation7], 4
      %s1582 = int_to_ptr.vmem [resolvable:$true] %s1581
      %1587 = dma.vmem_to_hbm [thread:$0]  %s1582, 256, %s2, [#allocation4], 128, 128, 8
    $region21: #{tpu_custom_call.1} parent=1 // pred_fallthru
      _
    // Predicated region
    $region22: #{tpu_custom_call.1} parent=1 // pred_check
      _
    $region23: #{tpu_custom_call.1} parent=1 // pred_check_branch
      %1589 = sbr.rel (0) target = $region25
    $region24: #{tpu_custom_call.1} parent=1 // pred_region
      %1590 = dma.done [#allocation4], 256
    $region25: #{tpu_custom_call.1} parent=1 // pred_fallthru
      _
    %1591 = vsyncpa [#allocation3], 1
    %1592 = vsyncpa [#allocation6], 1
    %1593 = vsyncpa [#allocation4], 1

</llo_original>
